<compile_context>
chip_gen: v5e
topology: v5e:2x2
jax: 0.10.0
libtpu: 0.0.40
codegen_flags: <defaults>
</compile_context>

<pallas_src>
import functools

import jax
import jax.numpy as jnp
from jax.experimental import pallas as pl
from jax.experimental.pallas import tpu as pltpu


# --------------------------------------------------------------------------------------
# Helpers
# --------------------------------------------------------------------------------------
def _round_up(n, m):
    return ((n + m - 1) // m) * m


def _pad_to(x, shape):
    pads = [(0, t - s) for s, t in zip(x.shape, shape)]
    if all(p == (0, 0) for p in pads):
        return x
    return jnp.pad(x, pads)


def normalize_adj(a):
    """DGL GraphConv norm='both' with degree clamp(min=1).  a: (R, N, N) = [r, dst, src]."""
    in_deg = jnp.maximum(a.sum(axis=2), 1.0)   # (R, N) in-degree of dst
    out_deg = jnp.maximum(a.sum(axis=1), 1.0)  # (R, N) out-degree of src
    return a * (in_deg ** -0.5)[:, :, None] * (out_deg ** -0.5)[:, None, :]


# --------------------------------------------------------------------------------------
# Pallas kernel: one HeteroGraphConv(GraphConv, aggregate='mean') layer
# grid = (dst tiles, relations, src tiles); output block stays resident over (r, k).
# --------------------------------------------------------------------------------------
def _rgcn_layer_kernel(a_ref, x_ref, w_ref, bm_ref, o_ref, *, inv_r, apply_relu):
    r = pl.program_id(1)
    k = pl.program_id(2)

    @pl.when((r == 0) & (k == 0))
    def _():
        o_ref[...] = jnp.zeros_like(o_ref)

    # bf16 operands on the MXU, f32 accumulation:  A_norm[r] @ (X @ W[r])
    xw = jnp.dot(x_ref[...], w_ref[...], preferred_element_type=jnp.float32)
    o_ref[...] += jnp.dot(a_ref[...], xw.astype(jnp.bfloat16),
                          preferred_element_type=jnp.float32)

    @pl.when((r == pl.num_programs(1) - 1) & (k == pl.num_programs(2) - 1))
    def _():
        # mean over relations (multiply by constant 1/R) + hoisted mean bias (+ optional ReLU)
        out = o_ref[...] * inv_r + bm_ref[...]
        if apply_relu:
            out = jnp.maximum(out, 0.0)
        o_ref[...] = out.astype(o_ref.dtype)


def rgcn_layer(a_p, x_p, w_p, b_mean_p, *, apply_relu):
    """One layer on pre-padded inputs.

    a_p:      (R, N_pad, N_pad) bf16  normalized adjacency, [r, dst, src]
    x_p:      (N_pad, F_in_p)   bf16  node features
    w_p:      (R, F_in_p, F_out_p) bf16
    b_mean_p: (1, F_out_p)      f32   mean-over-relations bias
    returns   (N_pad, F_out_p)  f32
    """
    R, n_pad, _ = a_p.shape
    f_in_p = x_p.shape[1]
    f_out_p = w_p.shape[2]

    # Tile sizes: lane-dense (multiples of 128); modest so a single relation slice never has to
    # fit VMEM whole (size-robust on v7x's 64 MiB VMEM).
    tm = 256 if n_pad % 256 == 0 else 128
    tk = 256 if n_pad % 256 == 0 else 128

    kernel = functools.partial(_rgcn_layer_kernel, inv_r=1.0 / R, apply_relu=apply_relu)
    return pl.pallas_call(
        kernel,
        out_shape=jax.ShapeDtypeStruct((n_pad, f_out_p), jnp.float32),
        grid_spec=pltpu.PrefetchScalarGridSpec(
            num_scalar_prefetch=0,
            grid=(n_pad // tm, R, n_pad // tk),
            in_specs=[
                # A_norm[r] tile (tm dst x tk src)
                pl.BlockSpec((pl.Squeezed(), tm, tk), lambda i, r, k: (r, i, k)),
                # X src tile (tk x F_in_p)
                pl.BlockSpec((tk, f_in_p), lambda i, r, k: (k, 0)),
                # W[r]
                pl.BlockSpec((pl.Squeezed(), f_in_p, f_out_p), lambda i, r, k: (r, 0, 0)),
                # mean bias (resident, loaded once)
                pl.BlockSpec((1, f_out_p), lambda i, r, k: (0, 0)),
            ],
            out_specs=pl.BlockSpec((tm, f_out_p), lambda i, r, k: (i, 0)),
        ),
        compiler_params=pltpu.CompilerParams(
            dimension_semantics=("parallel", "arbitrary", "arbitrary"),
        ),
    )(a_p, x_p, w_p, b_mean_p)


# --------------------------------------------------------------------------------------
# Full forward pass (conv1 + relu, conv2 + relu, conv3)
# --------------------------------------------------------------------------------------
def rgcn_forward(adj, x, params):
    R, N, _ = adj.shape
    in_feats = x.shape[1]
    hid_feats = params["w1"].shape[2]
    out_feats = params["w3"].shape[2]
    # conv3 is declared with in_feats=hid_feats but receives conv2's out_feats output.
    assert params["w3"].shape[1] == params["w2"].shape[2], "module requires hid_feats == out_feats"

    n_p = _round_up(N, 128)
    fi_p = _round_up(in_feats, 128)
    fh_p = _round_up(hid_feats, 128)
    fo_p = _round_up(out_feats, 128)

    # Normalize on the original adjacency, then zero-pad (padded rows/cols contribute nothing).
    a_norm = normalize_adj(adj.astype(jnp.float32))
    a_p = _pad_to(a_norm, (R, n_p, n_p)).astype(jnp.bfloat16)
    x_p = _pad_to(x.astype(jnp.float32), (n_p, fi_p)).astype(jnp.bfloat16)

    def prep(w, b, fi, fo):
        w_pad = _pad_to(w, (R, fi, fo)).astype(jnp.bfloat16)
        b_mean = _pad_to(b.mean(axis=0).reshape(1, -1), (1, fo)).astype(jnp.float32)
        return w_pad, b_mean

    w1p, b1m = prep(params["w1"], params["b1"], fi_p, fh_p)
    w2p, b2m = prep(params["w2"], params["b2"], fh_p, fo_p)
    w3p, b3m = prep(params["w3"], params["b3"], fh_p, fo_p)

    h = rgcn_layer(a_p, x_p, w1p, b1m, apply_relu=True)                       # conv1 + relu
    h = rgcn_layer(a_p, h.astype(jnp.bfloat16), w2p, b2m, apply_relu=True)    # conv2 + relu
    h = rgcn_layer(a_p, h.astype(jnp.bfloat16), w3p, b3m, apply_relu=False)   # conv3
    return h[:N, :out_feats]


# --------------------------------------------------------------------------------------
# Pure-JAX reference (mirrors the kernel's bf16-operand / f32-accumulate matmuls)
# --------------------------------------------------------------------------------------
def _ref_layer(a_norm, x, w, b, relu):
    xw = jnp.einsum("nf,rfk->rnk", x.astype(jnp.bfloat16), w.astype(jnp.bfloat16),
                    preferred_element_type=jnp.float32)
    y = jnp.einsum("rij,rjk->rik", a_norm.astype(jnp.bfloat16), xw.astype(jnp.bfloat16),
                   preferred_element_type=jnp.float32)
    y = y.mean(axis=0) + b.mean(axis=0)
    return jnp.maximum(y, 0.0) if relu else y


def _ref_forward(a_norm, x, params):
    h = _ref_layer(a_norm, x, params["w1"], params["b1"], True)
    h = _ref_layer(a_norm, h, params["w2"], params["b2"], True)
    return _ref_layer(a_norm, h, params["w3"], params["b3"], False)


def _xavier_uniform(key, shape):
    fan_in, fan_out = shape[-2], shape[-1]
    limit = (6.0 / (fan_in + fan_out)) ** 0.5
    return jax.random.uniform(key, shape, jnp.float32, -limit, limit)


if __name__ == "__main__":
    # Small synthetic sizes.
    N = 16                 # nodes
    R = 3                  # number of relations (rel_names)
    in_feats = 8
    hid_feats = 32
    out_feats = 32         # must equal hid_feats (see NOTE above)

    key = jax.random.PRNGKey(0)
    k_adj, k_x, k1, k2, k3, kb1, kb2, kb3 = jax.random.split(key, 8)

    # Random per-relation adjacency A[r, dst, src] and node features.
    adj = jax.random.bernoulli(k_adj, 0.3, (R, N, N)).astype(jnp.float32)
    x = jax.random.normal(k_x, (N, in_feats), jnp.float32)

    # GraphConv params per relation (xavier weights; small random biases to exercise bias path).
    params = {
        "w1": _xavier_uniform(k1, (R, in_feats, hid_feats)),
        "b1": 0.1 * jax.random.normal(kb1, (R, hid_feats), jnp.float32),
        "w2": _xavier_uniform(k2, (R, hid_feats, out_feats)),
        "b2": 0.1 * jax.random.normal(kb2, (R, out_feats), jnp.float32),
        "w3": _xavier_uniform(k3, (R, hid_feats, out_feats)),
        "b3": 0.1 * jax.random.normal(kb3, (R, out_feats), jnp.float32),
    }

    out = jax.jit(rgcn_forward)(adj, x, params)
    out = jax.block_until_ready(out)

    ref = _ref_forward(normalize_adj(adj), x, params)
    assert out.shape == (N, out_feats)
    assert jnp.allclose(out, ref, atol=1e-2, rtol=1e-2), "Pallas RGCN mismatch vs reference"

    print("KERNEL_OK")
</pallas_src>

<mosaic_0001>
module attributes {stable_mosaic.version = 11 : i64} {
  func.func @_rgcn_layer_kernel(%arg0: i32, %arg1: i32, %arg2: i32, %arg3: memref<1x128x128xbf16, #tpu.memory_space<vmem>>, %arg4: memref<128x128xbf16, #tpu.memory_space<vmem>>, %arg5: memref<1x128x128xbf16, #tpu.memory_space<vmem>>, %arg6: memref<1x128xf32, #tpu.memory_space<vmem>>, %arg7: memref<128x128xf32, #tpu.memory_space<vmem>>) attributes {dimension_semantics = [#tpu.dimension_semantics<parallel>, #tpu.dimension_semantics<arbitrary>, #tpu.dimension_semantics<arbitrary>], iteration_bounds = array<i64: 1, 3, 1>, scalar_prefetch = 0 : i64, scratch_operands = 0 : i64, tpu.core_type = #tpu.core_type<tc>, window_params = [{transform_indices = @transform_0, window_bounds = array<i64: 1, 128, 128>}, {transform_indices = @transform_1, window_bounds = array<i64: 128, 128>}, {transform_indices = @transform_2, window_bounds = array<i64: 1, 128, 128>}, {pipeline_mode = #tpu.pipeline_mode<synchronous>, transform_indices = @transform_3, window_bounds = array<i64: 1, 128>}, {transform_indices = @transform_4, window_bounds = array<i64: 128, 128>}]} {
    %c0_i32 = arith.constant 0 : i32
    %0 = arith.cmpi eq, %arg1, %c0_i32 : i32
    %c0_i32_0 = arith.constant 0 : i32
    %1 = arith.cmpi eq, %arg2, %c0_i32_0 : i32
    %2 = arith.andi %0, %1 : i1
    %3 = arith.extui %2 : i1 to i32
    %c0_i32_1 = arith.constant 0 : i32
    %4 = arith.cmpi ne, %3, %c0_i32_1 : i32
    scf.if %4 {
      %cst_16 = arith.constant 0.000000e+00 : f32
      %21 = vector.broadcast %cst_16 : f32 to vector<128x128xf32>
      %c0_17 = arith.constant 0 : index
      %c0_18 = arith.constant 0 : index
      %22 = vector.load %arg7[%c0_17, %c0_18] : memref<128x128xf32, #tpu.memory_space<vmem>>, vector<128x128xf32>
      tpu.vector_store %arg7[%c0_17, %c0_18], %21 {strides = array<i32>} : memref<128x128xf32, #tpu.memory_space<vmem>>, vector<128x128xf32>,
    } else {
    }
    %c0 = arith.constant 0 : index
    %c0_2 = arith.constant 0 : index
    %5 = vector.load %arg4[%c0, %c0_2] : memref<128x128xbf16, #tpu.memory_space<vmem>>, vector<128x128xbf16>
    %c0_3 = arith.constant 0 : index
    %c0_4 = arith.constant 0 : index
    %c0_5 = arith.constant 0 : index
    %6 = vector.load %arg5[%c0_3, %c0_4, %c0_5] : memref<1x128x128xbf16, #tpu.memory_space<vmem>>, vector<1x128x128xbf16>
    %7 = vector.shape_cast %6 : vector<1x128x128xbf16> to vector<128x128xbf16>
    %cst = arith.constant dense<0.000000e+00> : vector<128x128xf32>
    %8 = tpu.matmul %5, %7, %cst {dimension_numbers = #tpu.dot_dimension_numbers<[1], [0], [0], [1], [0, 0, 1, 1], [], []>} : vector<128x128xbf16>, vector<128x128xbf16>, vector<128x128xf32> -> vector<128x128xf32>
    %c0_6 = arith.constant 0 : index
    %c0_7 = arith.constant 0 : index
    %9 = vector.load %arg7[%c0_6, %c0_7] : memref<128x128xf32, #tpu.memory_space<vmem>>, vector<128x128xf32>
    %c0_8 = arith.constant 0 : index
    %c0_9 = arith.constant 0 : index
    %c0_10 = arith.constant 0 : index
    %10 = vector.load %arg3[%c0_8, %c0_9, %c0_10] : memref<1x128x128xbf16, #tpu.memory_space<vmem>>, vector<1x128x128xbf16>
    %11 = vector.shape_cast %10 : vector<1x128x128xbf16> to vector<128x128xbf16>
    %12 = arith.truncf %8 : vector<128x128xf32> to vector<128x128xbf16>
    %cst_11 = arith.constant dense<0.000000e+00> : vector<128x128xf32>
    %13 = tpu.matmul %11, %12, %cst_11 {dimension_numbers = #tpu.dot_dimension_numbers<[1], [0], [0], [1], [0, 0, 1, 1], [], []>} : vector<128x128xbf16>, vector<128x128xbf16>, vector<128x128xf32> -> vector<128x128xf32>
    %14 = arith.addf %9, %13 : vector<128x128xf32>
    %c0_12 = arith.constant 0 : index
    %c0_13 = arith.constant 0 : index
    %15 = vector.load %arg7[%c0_12, %c0_13] : memref<128x128xf32, #tpu.memory_space<vmem>>, vector<128x128xf32>
    tpu.vector_store %arg7[%c0_12, %c0_13], %14 {strides = array<i32>} : memref<128x128xf32, #tpu.memory_space<vmem>>, vector<128x128xf32>,
    %c2_i32 = arith.constant 2 : i32
    %16 = arith.cmpi eq, %arg1, %c2_i32 : i32
    %c0_i32_14 = arith.constant 0 : i32
    %17 = arith.cmpi eq, %arg2, %c0_i32_14 : i32
    %18 = arith.andi %16, %17 : i1
    %19 = arith.extui %18 : i1 to i32
    %c0_i32_15 = arith.constant 0 : i32
    %20 = arith.cmpi ne, %19, %c0_i32_15 : i32
    scf.if %20 {
      %c0_16 = arith.constant 0 : index
      %c0_17 = arith.constant 0 : index
      %21 = vector.load %arg7[%c0_16, %c0_17] : memref<128x128xf32, #tpu.memory_space<vmem>>, vector<128x128xf32>
      %cst_18 = arith.constant 0.333333343 : f32
      %22 = vector.broadcast %cst_18 : f32 to vector<128x128xf32>
      %23 = arith.mulf %21, %22 : vector<128x128xf32>
      %c0_19 = arith.constant 0 : index
      %c0_20 = arith.constant 0 : index
      %24 = vector.load %arg6[%c0_19, %c0_20] : memref<1x128xf32, #tpu.memory_space<vmem>>, vector<1x128xf32>
      %25 = vector.broadcast %24 : vector<1x128xf32> to vector<128x128xf32>
      %26 = arith.addf %23, %25 : vector<128x128xf32>
      %cst_21 = arith.constant 0.000000e+00 : f32
      %27 = vector.broadcast %cst_21 : f32 to vector<128x128xf32>
      %28 = arith.maximumf %26, %27 : vector<128x128xf32>
      %c0_22 = arith.constant 0 : index
      %c0_23 = arith.constant 0 : index
      %29 = vector.load %arg7[%c0_22, %c0_23] : memref<128x128xf32, #tpu.memory_space<vmem>>, vector<128x128xf32>
      tpu.vector_store %arg7[%c0_22, %c0_23], %28 {strides = array<i32>} : memref<128x128xf32, #tpu.memory_space<vmem>>, vector<128x128xf32>,
    } else {
    }
    return
  }
  func.func @transform_0(%arg0: i32, %arg1: i32, %arg2: i32) -> (i32, i32, i32) {
    %c0_i32 = arith.constant 0 : i32
    return %arg1, %arg0, %arg2 : i32, i32, i32
  }
  func.func @transform_1(%arg0: i32, %arg1: i32, %arg2: i32) -> (i32, i32) {
    %c0_i32 = arith.constant 0 : i32
    %c0_i32_0 = arith.constant 0 : i32
    return %arg2, %c0_i32 : i32, i32
  }
  func.func @transform_2(%arg0: i32, %arg1: i32, %arg2: i32) -> (i32, i32, i32) {
    %c0_i32 = arith.constant 0 : i32
    %c0_i32_0 = arith.constant 0 : i32
    %c0_i32_1 = arith.constant 0 : i32
    return %arg1, %c0_i32, %c0_i32_0 : i32, i32, i32
  }
  func.func @transform_3(%arg0: i32, %arg1: i32, %arg2: i32) -> (i32, i32) {
    %c0_i32 = arith.constant 0 : i32
    %c0_i32_0 = arith.constant 0 : i32
    %c0_i32_1 = arith.constant 0 : i32
    return %c0_i32, %c0_i32_0 : i32, i32
  }
  func.func @transform_4(%arg0: i32, %arg1: i32, %arg2: i32) -> (i32, i32) {
    %c0_i32 = arith.constant 0 : i32
    %c0_i32_0 = arith.constant 0 : i32
    return %arg0, %c0_i32 : i32, i32
  }
}

module attributes {stable_mosaic.version = 11 : i64} {
  func.func @_rgcn_layer_kernel(%arg0: i32, %arg1: i32, %arg2: i32, %arg3: memref<1x128x128xbf16, #tpu.memory_space<vmem>>, %arg4: memref<128x128xbf16, #tpu.memory_space<vmem>>, %arg5: memref<1x128x128xbf16, #tpu.memory_space<vmem>>, %arg6: memref<1x128xf32, #tpu.memory_space<vmem>>, %arg7: memref<128x128xf32, #tpu.memory_space<vmem>>) attributes {dimension_semantics = [#tpu.dimension_semantics<parallel>, #tpu.dimension_semantics<arbitrary>, #tpu.dimension_semantics<arbitrary>], iteration_bounds = array<i64: 1, 3, 1>, scalar_prefetch = 0 : i64, scratch_operands = 0 : i64, tpu.core_type = #tpu.core_type<tc>, window_params = [{transform_indices = @transform_0, window_bounds = array<i64: 1, 128, 128>}, {transform_indices = @transform_1, window_bounds = array<i64: 128, 128>}, {transform_indices = @transform_2, window_bounds = array<i64: 1, 128, 128>}, {pipeline_mode = #tpu.pipeline_mode<synchronous>, transform_indices = @transform_3, window_bounds = array<i64: 1, 128>}, {transform_indices = @transform_4, window_bounds = array<i64: 128, 128>}]} {
    %c0_i32 = arith.constant 0 : i32
    %0 = arith.cmpi eq, %arg1, %c0_i32 : i32
    %c0_i32_0 = arith.constant 0 : i32
    %1 = arith.cmpi eq, %arg2, %c0_i32_0 : i32
    %2 = arith.andi %0, %1 : i1
    %3 = arith.extui %2 : i1 to i32
    %c0_i32_1 = arith.constant 0 : i32
    %4 = arith.cmpi ne, %3, %c0_i32_1 : i32
    scf.if %4 {
      %cst_16 = arith.constant 0.000000e+00 : f32
      %21 = vector.broadcast %cst_16 : f32 to vector<128x128xf32>
      %c0_17 = arith.constant 0 : index
      %c0_18 = arith.constant 0 : index
      %22 = vector.load %arg7[%c0_17, %c0_18] : memref<128x128xf32, #tpu.memory_space<vmem>>, vector<128x128xf32>
      tpu.vector_store %arg7[%c0_17, %c0_18], %21 {strides = array<i32>} : memref<128x128xf32, #tpu.memory_space<vmem>>, vector<128x128xf32>,
    } else {
    }
    %c0 = arith.constant 0 : index
    %c0_2 = arith.constant 0 : index
    %5 = vector.load %arg4[%c0, %c0_2] : memref<128x128xbf16, #tpu.memory_space<vmem>>, vector<128x128xbf16>
    %c0_3 = arith.constant 0 : index
    %c0_4 = arith.constant 0 : index
    %c0_5 = arith.constant 0 : index
    %6 = vector.load %arg5[%c0_3, %c0_4, %c0_5] : memref<1x128x128xbf16, #tpu.memory_space<vmem>>, vector<1x128x128xbf16>
    %7 = vector.shape_cast %6 : vector<1x128x128xbf16> to vector<128x128xbf16>
    %cst = arith.constant dense<0.000000e+00> : vector<128x128xf32>
    %8 = tpu.matmul %5, %7, %cst {dimension_numbers = #tpu.dot_dimension_numbers<[1], [0], [0], [1], [0, 0, 1, 1], [], []>} : vector<128x128xbf16>, vector<128x128xbf16>, vector<128x128xf32> -> vector<128x128xf32>
    %c0_6 = arith.constant 0 : index
    %c0_7 = arith.constant 0 : index
    %9 = vector.load %arg7[%c0_6, %c0_7] : memref<128x128xf32, #tpu.memory_space<vmem>>, vector<128x128xf32>
    %c0_8 = arith.constant 0 : index
    %c0_9 = arith.constant 0 : index
    %c0_10 = arith.constant 0 : index
    %10 = vector.load %arg3[%c0_8, %c0_9, %c0_10] : memref<1x128x128xbf16, #tpu.memory_space<vmem>>, vector<1x128x128xbf16>
    %11 = vector.shape_cast %10 : vector<1x128x128xbf16> to vector<128x128xbf16>
    %12 = arith.truncf %8 : vector<128x128xf32> to vector<128x128xbf16>
    %cst_11 = arith.constant dense<0.000000e+00> : vector<128x128xf32>
    %13 = tpu.matmul %11, %12, %cst_11 {dimension_numbers = #tpu.dot_dimension_numbers<[1], [0], [0], [1], [0, 0, 1, 1], [], []>} : vector<128x128xbf16>, vector<128x128xbf16>, vector<128x128xf32> -> vector<128x128xf32>
    %14 = arith.addf %9, %13 : vector<128x128xf32>
    %c0_12 = arith.constant 0 : index
    %c0_13 = arith.constant 0 : index
    %15 = vector.load %arg7[%c0_12, %c0_13] : memref<128x128xf32, #tpu.memory_space<vmem>>, vector<128x128xf32>
    tpu.vector_store %arg7[%c0_12, %c0_13], %14 {strides = array<i32>} : memref<128x128xf32, #tpu.memory_space<vmem>>, vector<128x128xf32>,
    %c2_i32 = arith.constant 2 : i32
    %16 = arith.cmpi eq, %arg1, %c2_i32 : i32
    %c0_i32_14 = arith.constant 0 : i32
    %17 = arith.cmpi eq, %arg2, %c0_i32_14 : i32
    %18 = arith.andi %16, %17 : i1
    %19 = arith.extui %18 : i1 to i32
    %c0_i32_15 = arith.constant 0 : i32
    %20 = arith.cmpi ne, %19, %c0_i32_15 : i32
    scf.if %20 {
      %c0_16 = arith.constant 0 : index
      %c0_17 = arith.constant 0 : index
      %21 = vector.load %arg7[%c0_16, %c0_17] : memref<128x128xf32, #tpu.memory_space<vmem>>, vector<128x128xf32>
      %cst_18 = arith.constant 0.333333343 : f32
      %22 = vector.broadcast %cst_18 : f32 to vector<128x128xf32>
      %23 = arith.mulf %21, %22 : vector<128x128xf32>
      %c0_19 = arith.constant 0 : index
      %c0_20 = arith.constant 0 : index
      %24 = vector.load %arg6[%c0_19, %c0_20] : memref<1x128xf32, #tpu.memory_space<vmem>>, vector<1x128xf32>
      %25 = vector.broadcast %24 : vector<1x128xf32> to vector<128x128xf32>
      %26 = arith.addf %23, %25 : vector<128x128xf32>
      %c0_21 = arith.constant 0 : index
      %c0_22 = arith.constant 0 : index
      %27 = vector.load %arg7[%c0_21, %c0_22] : memref<128x128xf32, #tpu.memory_space<vmem>>, vector<128x128xf32>
      tpu.vector_store %arg7[%c0_21, %c0_22], %26 {strides = array<i32>} : memref<128x128xf32, #tpu.memory_space<vmem>>, vector<128x128xf32>,
    } else {
    }
    return
  }
  func.func @transform_0(%arg0: i32, %arg1: i32, %arg2: i32) -> (i32, i32, i32) {
    %c0_i32 = arith.constant 0 : i32
    return %arg1, %arg0, %arg2 : i32, i32, i32
  }
  func.func @transform_1(%arg0: i32, %arg1: i32, %arg2: i32) -> (i32, i32) {
    %c0_i32 = arith.constant 0 : i32
    %c0_i32_0 = arith.constant 0 : i32
    return %arg2, %c0_i32 : i32, i32
  }
  func.func @transform_2(%arg0: i32, %arg1: i32, %arg2: i32) -> (i32, i32, i32) {
    %c0_i32 = arith.constant 0 : i32
    %c0_i32_0 = arith.constant 0 : i32
    %c0_i32_1 = arith.constant 0 : i32
    return %arg1, %c0_i32, %c0_i32_0 : i32, i32, i32
  }
  func.func @transform_3(%arg0: i32, %arg1: i32, %arg2: i32) -> (i32, i32) {
    %c0_i32 = arith.constant 0 : i32
    %c0_i32_0 = arith.constant 0 : i32
    %c0_i32_1 = arith.constant 0 : i32
    return %c0_i32, %c0_i32_0 : i32, i32
  }
  func.func @transform_4(%arg0: i32, %arg1: i32, %arg2: i32) -> (i32, i32) {
    %c0_i32 = arith.constant 0 : i32
    %c0_i32_0 = arith.constant 0 : i32
    return %arg0, %c0_i32 : i32, i32
  }
}

</mosaic_0001>

<llo_original>
// kernel: rgcn_forward.5
$region0: #{rgcn_forward.5}
  #allocation0 [shape = 'u32[]', space=smem, size = 0x4, offset = 0x4, fixed_abs, tag = 'smem constant byte address 0x4 - core index']
  #allocation1 [shape = 'u32[72,128]{1,0:T(1,128)}', space=vmem, size = 0x9000, scoped, tag = 'internal scratch']
  %s0 = inlined_call_operand.vmem [shape: bf16[3,128,128], index: 0, kind: input, shape index: {}]
  %s1 = inlined_call_operand.vmem [shape: bf16[128,128], index: 1, kind: input, shape index: {}]
  %s2 = inlined_call_operand.vmem [shape: bf16[3,128,128], index: 2, kind: input, shape index: {}]
  %s3 = inlined_call_operand.vmem [shape: f32[1,128], index: 3, kind: input, shape index: {}]
  %s4 = inlined_call_operand.vmem [shape: f32[128,128], index: 4, kind: output, shape index: {}]
  %s5 = sld [smem:[#allocation0]]
  $region57: #{rgcn_forward.5} parent=0
    _
  %s7 = ssub.s32 1, %s5
  %s8 = scalar_select 0, %s7, %s5
  loop: start=0, step=1, limit=5
  $region2: #{rgcn_forward.5} parent=0 // loop_pre_header
    _
  $region3: #{rgcn_forward.5} parent=0 // loop_header
    %s10 = sphi 0, %s14
    %p11 = scmp.ge.s32.totalorder %s10, 5
    %s17 = sphi 0, %s36
    %s18 = sphi 0, %s32
    %s19 = sphi 0, %s28
    %s20 = sphi 0, %s17
    %s21 = sphi 0, %s18
    %s22 = sphi 0, %s19
    %s23 = sphi 0, %s20
    %s24 = sphi 0, %s21
    %s25 = sphi 0, %s22
    %s43 = sphi 0, %s45
    %s46 = sphi 0, %s43
    %s47 = sphi 0, %s46
    %s63 = sphi 0, %s47
    %s69 = sphi 0, %s71
    %s72 = sphi 0, %s69
    %s73 = sphi 0, %s72
    %s89 = sphi 0, %s73
    %s95 = sphi 0, %s97
    %s98 = sphi 0, %s95
    %s99 = sphi 0, %s98
    %s115 = sphi 0, %s99
    %s119 = sphi 0, %s119
    %s121 = sphi 0, %s119
    %s122 = sphi 0, %s121
    %s136 = sphi 0, %s122
    %s142 = sphi 0, %s144
    %s145 = sphi 0, %s142
    %s146 = sphi 0, %s145
    %s162 = sphi 0, %s146
  $region4: #{rgcn_forward.5} parent=0 // loop_header_branch
    %13 = sbr.rel (%p11) target = $region8
  $region5: #{rgcn_forward.5} parent=0 // loop_body
    %s15 = ssub.s32 %s10, 1
    %s16 = ssub.s32 %s10, 2
    %s26 = sadd.s32 1, %s19
    %p27 = scmp.ge.s32.totalorder %s26, 1
    %s28 = scalar_select %p27, 0, %s26
    %s29 = sadd.s32 1, %s18
    %s30 = scalar_select %p27, %s29, %s18
    %p31 = scmp.ge.s32.totalorder %s30, 3
    %s32 = scalar_select %p31, 0, %s30
    %s33 = sadd.s32 1, %s17
    %s34 = scalar_select %p31, %s33, %s17
    %p35 = scmp.ge.s32.totalorder %s34, 1
    %s36 = scalar_select %p35, 0, %s34
    %s37 = ssub.s32 %s18, %s32
    %s38 = ssub.s32 %s17, %s36
    %s39 = sor.u32 %s37, %s38
    %s40 = ssub.s32 %s19, %s28
    %s41 = sor.u32 %s39, %s40
    %p42 = scmp.eq.s32.totalorder %s41, 0
    %s44 = sadd.s32 %s43, 1
    %s45 = scalar_select %p42, %s43, %s44
    %p48 = pneg %p42
    %p49 = scmp.eq.s32.totalorder %s10, 2
    %p50 = por %p48, %p49
    %p51 = scmp.ne.s32.totalorder %s43, %s46
    %p52 = scmp.eq.s32.totalorder %s10, 0
    %p53 = por %p51, %p52
    %p54 = scmp.ne.s32.totalorder %s43, %s46
    %p55 = scmp.eq.s32.totalorder %s15, 2
    %p56 = por %p54, %p55
    %p57 = scmp.ne.s32.totalorder %s46, %s47
    %p58 = scmp.eq.s32.totalorder %s15, 0
    %p59 = por %p57, %p58
    %p60 = scmp.ne.s32.totalorder %s46, %s47
    %p61 = scmp.eq.s32.totalorder %s16, 2
    %p62 = por %p60, %p61
    %p64 = scmp.ne.s32.totalorder %s47, %s63
    %p65 = scmp.eq.s32.totalorder %s16, 0
    %p66 = por %p64, %p65
    %s67 = ssub.s32 %s19, %s28
    %p68 = scmp.eq.s32.totalorder %s67, 0
    %s70 = sadd.s32 %s69, 1
    %s71 = scalar_select %p68, %s69, %s70
    %p74 = pneg %p68
    %p75 = scmp.eq.s32.totalorder %s10, 2
    %p76 = por %p74, %p75
    %p77 = scmp.ne.s32.totalorder %s69, %s72
    %p78 = scmp.eq.s32.totalorder %s10, 0
    %p79 = por %p77, %p78
    %p80 = scmp.ne.s32.totalorder %s69, %s72
    %p81 = scmp.eq.s32.totalorder %s15, 2
    %p82 = por %p80, %p81
    %p83 = scmp.ne.s32.totalorder %s72, %s73
    %p84 = scmp.eq.s32.totalorder %s15, 0
    %p85 = por %p83, %p84
    %p86 = scmp.ne.s32.totalorder %s72, %s73
    %p87 = scmp.eq.s32.totalorder %s16, 2
    %p88 = por %p86, %p87
    %p90 = scmp.ne.s32.totalorder %s73, %s89
    %p91 = scmp.eq.s32.totalorder %s16, 0
    %p92 = por %p90, %p91
    %s93 = ssub.s32 %s18, %s32
    %p94 = scmp.eq.s32.totalorder %s93, 0
    %s96 = sadd.s32 %s95, 1
    %s97 = scalar_select %p94, %s95, %s96
    %p100 = pneg %p94
    %p101 = scmp.eq.s32.totalorder %s10, 2
    %p102 = por %p100, %p101
    %p103 = scmp.ne.s32.totalorder %s95, %s98
    %p104 = scmp.eq.s32.totalorder %s10, 0
    %p105 = por %p103, %p104
    %p106 = scmp.ne.s32.totalorder %s95, %s98
    %p107 = scmp.eq.s32.totalorder %s15, 2
    %p108 = por %p106, %p107
    %p109 = scmp.ne.s32.totalorder %s98, %s99
    %p110 = scmp.eq.s32.totalorder %s15, 0
    %p111 = por %p109, %p110
    %p112 = scmp.ne.s32.totalorder %s98, %s99
    %p113 = scmp.eq.s32.totalorder %s16, 2
    %p114 = por %p112, %p113
    %p116 = scmp.ne.s32.totalorder %s99, %s115
    %p117 = scmp.eq.s32.totalorder %s16, 0
    %p118 = por %p116, %p117
    %s120 = sadd.s32 %s119, 1
    %p123 = scmp.eq.s32.totalorder %s10, 2
    %p124 = scmp.ne.s32.totalorder %s119, %s121
    %p125 = scmp.eq.s32.totalorder %s10, 0
    %p126 = por %p124, %p125
    %p127 = scmp.ne.s32.totalorder %s119, %s121
    %p128 = scmp.eq.s32.totalorder %s15, 2
    %p129 = por %p127, %p128
    %p130 = scmp.ne.s32.totalorder %s121, %s122
    %p131 = scmp.eq.s32.totalorder %s15, 0
    %p132 = por %p130, %p131
    %p133 = scmp.ne.s32.totalorder %s121, %s122
    %p134 = scmp.eq.s32.totalorder %s16, 2
    %p135 = por %p133, %p134
    %p137 = scmp.ne.s32.totalorder %s122, %s136
    %p138 = scmp.eq.s32.totalorder %s16, 0
    %p139 = por %p137, %p138
    %s140 = ssub.s32 %s17, %s36
    %p141 = scmp.eq.s32.totalorder %s140, 0
    %s143 = sadd.s32 %s142, 1
    %s144 = scalar_select %p141, %s142, %s143
    %p147 = pneg %p141
    %p148 = scmp.eq.s32.totalorder %s10, 2
    %p149 = por %p147, %p148
    %p150 = scmp.ne.s32.totalorder %s142, %s145
    %p151 = scmp.eq.s32.totalorder %s10, 0
    %p152 = por %p150, %p151
    %p153 = scmp.ne.s32.totalorder %s142, %s145
    %p154 = scmp.eq.s32.totalorder %s15, 2
    %p155 = por %p153, %p154
    %p156 = scmp.ne.s32.totalorder %s145, %s146
    %p157 = scmp.eq.s32.totalorder %s15, 0
    %p158 = por %p156, %p157
    %p159 = scmp.ne.s32.totalorder %s145, %s146
    %p160 = scmp.eq.s32.totalorder %s16, 2
    %p161 = por %p159, %p160
    %p163 = scmp.ne.s32.totalorder %s146, %s162
    %p164 = scmp.eq.s32.totalorder %s16, 0
    %p165 = por %p163, %p164
    %p166 = scmp.le.s32.totalorder 1, %s10
    %p167 = scmp.lt.s32.totalorder %s10, 4
    %p168 = pnand %p166, %p167
    %p169 = pneg %p168
    // Predicated region
    $region9: #{rgcn_forward.5} parent=5 // pred_check
      _
    $region10: #{rgcn_forward.5} parent=5 // pred_check_branch
      %171 = sbr.rel (%p168) target = $region12
    $region11: #{rgcn_forward.5} parent=5 // pred_region
      %s172 = ssub.s32 %s10, 1
      // Predicated region
      $region13: #{rgcn_forward.5} parent=11 // pred_check
        %p173 = pneg %p85
      $region14: #{rgcn_forward.5} parent=11 // pred_check_branch
        %175 = sbr.rel (%p173) target = $region16
      $region15: #{rgcn_forward.5} parent=11 // pred_region
        %s176 = smul.u32 16, %s22
        %p177 = scmp.lt.s32.totalorder %s176, 15
        %s178 = scalar_select %p177, %s176, 15
        %s179 = smul.addr %s178, 4
        %s180 = scalar_lea.vmem %s1, %s179
        %s181 = smul.u32 16, %s22
      $region16: #{rgcn_forward.5} parent=11 // pred_fallthru
        _
      // Predicated region
      $region17: #{rgcn_forward.5} parent=11 // pred_check
        %p182 = pneg %p132
      $region18: #{rgcn_forward.5} parent=11 // pred_check_branch
        %184 = sbr.rel (%p182) target = $region20
      $region19: #{rgcn_forward.5} parent=11 // pred_region
        _
      $region20: #{rgcn_forward.5} parent=11 // pred_fallthru
        _
    $region12: #{rgcn_forward.5} parent=5 // pred_fallthru
      _
    %p185 = scmp.lt.s32.totalorder %s10, 3
    // Predicated region
    $region21: #{rgcn_forward.5} parent=5 // pred_check
      %p186 = pneg %p185
    $region22: #{rgcn_forward.5} parent=5 // pred_check_branch
      %188 = sbr.rel (%p186) target = $region24
    $region23: #{rgcn_forward.5} parent=5 // pred_region
      // Predicated region
      $region25: #{rgcn_forward.5} parent=23 // pred_check
        %p189 = pneg %p53
      $region26: #{rgcn_forward.5} parent=23 // pred_check_branch
        %191 = sbr.rel (%p189) target = $region28
      $region27: #{rgcn_forward.5} parent=23 // pred_region
        %s192 = smul.u32 16, %s17
        %p193 = scmp.lt.s32.totalorder %s18, 2
        %s194 = scalar_select %p193, %s18, 2
        %p195 = scmp.lt.s32.totalorder %s192, 15
        %s196 = scalar_select %p195, %s192, 15
        %p197 = scmp.lt.s32.totalorder %s19, 0
        %s198 = scalar_select %p197, %s19, 0
        %s199 = sadd.s32 %s198, %s196
        %s200 = smul.addr %s194, 16
        %s201 = sadd.s32 %s199, %s200
        %s202 = smul.addr %s201, 4
        %s203 = scalar_lea.vmem %s0, %s202
        %s204 = smul.u32 16, %s17
      $region28: #{rgcn_forward.5} parent=23 // pred_fallthru
        _
      // Predicated region
      $region29: #{rgcn_forward.5} parent=23 // pred_check
        %p205 = pneg %p105
      $region30: #{rgcn_forward.5} parent=23 // pred_check_branch
        %207 = sbr.rel (%p205) target = $region32
      $region31: #{rgcn_forward.5} parent=23 // pred_region
        %p208 = scmp.lt.s32.totalorder %s18, 2
        %s209 = scalar_select %p208, %s18, 2
        %s210 = smul.addr %s209, 16
        %s211 = smul.addr %s210, 4
        %s212 = scalar_lea.vmem %s2, %s211
      $region32: #{rgcn_forward.5} parent=23 // pred_fallthru
        _
    $region24: #{rgcn_forward.5} parent=5 // pred_fallthru
      _
    %p213 = scmp.le.s32.totalorder 1, %s10
    %p214 = scmp.lt.s32.totalorder %s10, 4
    %p215 = pnand %p213, %p214
    %p216 = pneg %p215
    // Predicated region
    $region33: #{rgcn_forward.5} parent=5 // pred_check
      _
    $region34: #{rgcn_forward.5} parent=5 // pred_check_branch
      %218 = sbr.rel (%p215) target = $region36
    $region35: #{rgcn_forward.5} parent=5 // pred_region
      %s219 = ssub.s32 %s10, 1
      %s220 = smul.u32 16, %s20
      %p221 = scmp.lt.s32.totalorder %s21, 2
      %s222 = scalar_select %p221, %s21, 2
      %p223 = scmp.lt.s32.totalorder %s220, 15
      %s224 = scalar_select %p223, %s220, 15
      %p225 = scmp.lt.s32.totalorder %s22, 0
      %s226 = scalar_select %p225, %s22, 0
      %s227 = sadd.s32 %s226, %s224
      %s228 = smul.addr %s222, 16
      %s229 = sadd.s32 %s227, %s228
      %s230 = smul.addr %s229, 4
      %s231 = scalar_lea.vmem %s0, %s230
      %p232 = pneg %p59
      %p233 = pneg %p56
      %s234 = smul.u32 16, %s22
      %p235 = scmp.lt.s32.totalorder %s234, 15
      %s236 = scalar_select %p235, %s234, 15
      %s237 = smul.addr %s236, 4
      %s238 = scalar_lea.vmem %s1, %s237
      %p239 = pneg %p85
      %p240 = pneg %p82
      %p241 = scmp.lt.s32.totalorder %s21, 2
      %s242 = scalar_select %p241, %s21, 2
      %s243 = smul.addr %s242, 16
      %s244 = smul.addr %s243, 4
      %s245 = scalar_lea.vmem %s2, %s244
      %p246 = pneg %p111
      %p247 = pneg %p108
      %p248 = pneg %p132
      %p249 = pneg %p129
      %p250 = pneg %p158
      %p251 = pneg %p155
      %s252 = smul.u32 16, %s20
      %p253 = scmp.lt.s32.totalorder %s252, 15
      %s254 = scalar_select %p253, %s252, 15
      %s255 = smul.addr %s254, 8
      %s256 = scalar_lea.vmem %s4, %s255
      %s257 = smul.u32 16, %s20
      %p258 = scmp.lt.s32.totalorder %s21, 2
      %s259 = scalar_select %p258, %s21, 2
      %p260 = scmp.lt.s32.totalorder %s257, 15
      %s261 = scalar_select %p260, %s257, 15
      %p262 = scmp.lt.s32.totalorder %s22, 0
      %s263 = scalar_select %p262, %s22, 0
      %s264 = sadd.s32 %s263, %s261
      %s265 = smul.addr %s259, 16
      %s266 = sadd.s32 %s264, %s265
      %s267 = smul.addr %s266, 4
      %s268 = scalar_lea.vmem %s0, %s267
      %s269 = smul.u32 16, %s20
      %s270 = smul.u32 16, %s22
      %p271 = scmp.lt.s32.totalorder %s270, 15
      %s272 = scalar_select %p271, %s270, 15
      %s273 = smul.addr %s272, 4
      %s274 = scalar_lea.vmem %s1, %s273
      %s275 = smul.u32 16, %s22
      %p276 = scmp.lt.s32.totalorder %s21, 2
      %s277 = scalar_select %p276, %s21, 2
      %s278 = smul.addr %s277, 16
      %s279 = smul.addr %s278, 4
      %s280 = scalar_lea.vmem %s2, %s279
      %s281 = smul.u32 16, %s20
      %p282 = scmp.lt.s32.totalorder %s281, 15
      %s283 = scalar_select %p282, %s281, 15
      %s284 = smul.addr %s283, 8
      %s285 = scalar_lea.vmem %s4, %s284
      %s286 = smul.u32 16, %s20
      %p287 = scmp.eq.s32.totalorder %s21, 0
      %p288 = scmp.eq.s32.totalorder %s22, 0
      %p289 = pnand %p287, %p288
      %p290 = pneg %p289
      // Predicated region
      $region37: #{rgcn_forward.5} parent=35 // pred_check
        _
      $region38: #{rgcn_forward.5} parent=35 // pred_check_branch
        %292 = sbr.rel (%p289) target = $region40
      $region39: #{rgcn_forward.5} parent=35 // pred_region
        %293 = vst [vmem:[%s285] sm:$0xff] 0.0
        %294 = vst [vmem:[%s285 + $0x8] sm:$0xff] 0.0
        %295 = vst [vmem:[%s285 + $0x10] sm:$0xff] 0.0
        %296 = vst [vmem:[%s285 + $0x18] sm:$0xff] 0.0
        %297 = vst [vmem:[%s285 + $0x20] sm:$0xff] 0.0
        %298 = vst [vmem:[%s285 + $0x28] sm:$0xff] 0.0
        %299 = vst [vmem:[%s285 + $0x30] sm:$0xff] 0.0
        %300 = vst [vmem:[%s285 + $0x38] sm:$0xff] 0.0
        %301 = vst [vmem:[%s285 + $0x40] sm:$0xff] 0.0
        %302 = vst [vmem:[%s285 + $0x48] sm:$0xff] 0.0
        %303 = vst [vmem:[%s285 + $0x50] sm:$0xff] 0.0
        %304 = vst [vmem:[%s285 + $0x58] sm:$0xff] 0.0
        %305 = vst [vmem:[%s285 + $0x60] sm:$0xff] 0.0
        %306 = vst [vmem:[%s285 + $0x68] sm:$0xff] 0.0
        %307 = vst [vmem:[%s285 + $0x70] sm:$0xff] 0.0
        %308 = vst [vmem:[%s285 + $0x78] sm:$0xff] 0.0
      $region40: #{rgcn_forward.5} parent=35 // pred_fallthru
        _
      %v309 = vld [vmem:[%s274] sm:$0xf]
      %v310 = vld [vmem:[%s274 + $0x4] sm:$0xf]
      %v311 = vld [vmem:[%s274 + $0x8] sm:$0xf]
      %v312 = vld [vmem:[%s274 + $0xc] sm:$0xf]
      %v313 = vld [vmem:[%s274 + $0x10] sm:$0xf]
      %v314 = vld [vmem:[%s274 + $0x14] sm:$0xf]
      %v315 = vld [vmem:[%s274 + $0x18] sm:$0xf]
      %v316 = vld [vmem:[%s274 + $0x1c] sm:$0xf]
      %v317 = vld [vmem:[%s274 + $0x20] sm:$0xf]
      %v318 = vld [vmem:[%s274 + $0x24] sm:$0xf]
      %v319 = vld [vmem:[%s274 + $0x28] sm:$0xf]
      %v320 = vld [vmem:[%s274 + $0x2c] sm:$0xf]
      %v321 = vld [vmem:[%s274 + $0x30] sm:$0xf]
      %v322 = vld [vmem:[%s274 + $0x34] sm:$0xf]
      %v323 = vld [vmem:[%s274 + $0x38] sm:$0xf]
      %v324 = vld [vmem:[%s274 + $0x3c] sm:$0xf]
      %v325 = vld [vmem:[%s280] sm:$0xf]
      %v326 = vld [vmem:[%s280 + $0x4] sm:$0xf]
      %v327 = vld [vmem:[%s280 + $0x8] sm:$0xf]
      %v328 = vld [vmem:[%s280 + $0xc] sm:$0xf]
      %v329 = vld [vmem:[%s280 + $0x10] sm:$0xf]
      %v330 = vld [vmem:[%s280 + $0x14] sm:$0xf]
      %v331 = vld [vmem:[%s280 + $0x18] sm:$0xf]
      %v332 = vld [vmem:[%s280 + $0x1c] sm:$0xf]
      %v333 = vld [vmem:[%s280 + $0x20] sm:$0xf]
      %v334 = vld [vmem:[%s280 + $0x24] sm:$0xf]
      %v335 = vld [vmem:[%s280 + $0x28] sm:$0xf]
      %v336 = vld [vmem:[%s280 + $0x2c] sm:$0xf]
      %v337 = vld [vmem:[%s280 + $0x30] sm:$0xf]
      %v338 = vld [vmem:[%s280 + $0x34] sm:$0xf]
      %v339 = vld [vmem:[%s280 + $0x38] sm:$0xf]
      %v340 = vld [vmem:[%s280 + $0x3c] sm:$0xf]
      %v357 = vunpack.c.l.b16 %v309
      %v358 = vunpack.c.l.b16 %v310
      %v359 = vunpack.c.l.b16 %v311
      %v360 = vunpack.c.l.b16 %v312
      %v361 = vunpack.c.l.b16 %v313
      %v362 = vunpack.c.l.b16 %v314
      %v363 = vunpack.c.l.b16 %v315
      %v364 = vunpack.c.l.b16 %v316
      %v365 = vunpack.c.l.b16 %v317
      %v366 = vunpack.c.l.b16 %v318
      %v367 = vunpack.c.l.b16 %v319
      %v368 = vunpack.c.l.b16 %v320
      %v369 = vunpack.c.l.b16 %v321
      %v370 = vunpack.c.l.b16 %v322
      %v371 = vunpack.c.l.b16 %v323
      %v372 = vunpack.c.l.b16 %v324
      %v373 = vpack.c.b16 %v358, %v357
      %v374 = vpack.c.b16 %v360, %v359
      %v375 = vpack.c.b16 %v362, %v361
      %v376 = vpack.c.b16 %v364, %v363
      %v377 = vpack.c.b16 %v366, %v365
      %v378 = vpack.c.b16 %v368, %v367
      %v379 = vpack.c.b16 %v370, %v369
      %v380 = vpack.c.b16 %v372, %v371
      %v405 = vunpack.c.l.b16 %v325
      %v406 = vunpack.c.l.b16 %v326
      %v407 = vunpack.c.l.b16 %v327
      %v408 = vunpack.c.l.b16 %v328
      %v409 = vunpack.c.l.b16 %v329
      %v410 = vunpack.c.l.b16 %v330
      %v411 = vunpack.c.l.b16 %v331
      %v412 = vunpack.c.l.b16 %v332
      %v413 = vunpack.c.l.b16 %v333
      %v414 = vunpack.c.l.b16 %v334
      %v415 = vunpack.c.l.b16 %v335
      %v416 = vunpack.c.l.b16 %v336
      %v417 = vunpack.c.l.b16 %v337
      %v418 = vunpack.c.l.b16 %v338
      %v419 = vunpack.c.l.b16 %v339
      %v420 = vunpack.c.l.b16 %v340
      %v421 = vpack.c.b16 %v406, %v405
      %v422 = vpack.c.b16 %v408, %v407
      %v423 = vpack.c.b16 %v410, %v409
      %v424 = vpack.c.b16 %v412, %v411
      %v425 = vpack.c.b16 %v414, %v413
      %v426 = vpack.c.b16 %v416, %v415
      %v427 = vpack.c.b16 %v418, %v417
      %v428 = vpack.c.b16 %v420, %v419
      %437 = vmatpush.bf16.msra.mxu0 %v428
      %438 = vmatpush.bf16.msra.mxu0 %v427
      %439 = vmatpush.bf16.msra.mxu0 %v426
      %440 = vmatpush.bf16.msra.mxu0 %v425
      %441 = vmatpush.bf16.msra.mxu0 %v424
      %442 = vmatpush.bf16.msra.mxu0 %v423
      %443 = vmatpush.bf16.msra.mxu0 %v422
      %444 = vmatpush.bf16.msra.mxu0 %v421
      %445 = vmatmul.bf16.gmra.mxu0 %v373
      %v446 = vpop.f32.mrf.mxu0
      %v447 = vadd.f32 0.0, %v446
      %v448 = vpop.f32.mrf.mxu0
      %v449 = vadd.f32 0.0, %v448
      %450 = vmatmul.bf16.gmra.mxu0 %v374
      %v451 = vpop.f32.mrf.mxu0
      %v452 = vadd.f32 0.0, %v451
      %v453 = vpop.f32.mrf.mxu0
      %v454 = vadd.f32 0.0, %v453
      %455 = vmatmul.bf16.gmra.mxu0 %v375
      %v456 = vpop.f32.mrf.mxu0
      %v457 = vadd.f32 0.0, %v456
      %v458 = vpop.f32.mrf.mxu0
      %v459 = vadd.f32 0.0, %v458
      %460 = vmatmul.bf16.gmra.mxu0 %v376
      %v461 = vpop.f32.mrf.mxu0
      %v462 = vadd.f32 0.0, %v461
      %v463 = vpop.f32.mrf.mxu0
      %v464 = vadd.f32 0.0, %v463
      %465 = vmatmul.bf16.gmra.mxu0 %v377
      %v466 = vpop.f32.mrf.mxu0
      %v467 = vadd.f32 0.0, %v466
      %v468 = vpop.f32.mrf.mxu0
      %v469 = vadd.f32 0.0, %v468
      %470 = vmatmul.bf16.gmra.mxu0 %v378
      %v471 = vpop.f32.mrf.mxu0
      %v472 = vadd.f32 0.0, %v471
      %v473 = vpop.f32.mrf.mxu0
      %v474 = vadd.f32 0.0, %v473
      %475 = vmatmul.bf16.gmra.mxu0 %v379
      %v476 = vpop.f32.mrf.mxu0
      %v477 = vadd.f32 0.0, %v476
      %v478 = vpop.f32.mrf.mxu0
      %v479 = vadd.f32 0.0, %v478
      %480 = vmatmul.bf16.gmra.mxu0 %v380
      %v481 = vpop.f32.mrf.mxu0
      %v482 = vadd.f32 0.0, %v481
      %v483 = vpop.f32.mrf.mxu0
      %v484 = vadd.f32 0.0, %v483
      %485 = vdwg.mxu0
      %v486 = vld [vmem:[%s285] sm:$0xff]
      %v487 = vld [vmem:[%s285 + $0x8] sm:$0xff]
      %v488 = vld [vmem:[%s285 + $0x10] sm:$0xff]
      %v489 = vld [vmem:[%s285 + $0x18] sm:$0xff]
      %v490 = vld [vmem:[%s285 + $0x20] sm:$0xff]
      %v491 = vld [vmem:[%s285 + $0x28] sm:$0xff]
      %v492 = vld [vmem:[%s285 + $0x30] sm:$0xff]
      %v493 = vld [vmem:[%s285 + $0x38] sm:$0xff]
      %v494 = vld [vmem:[%s285 + $0x40] sm:$0xff]
      %v495 = vld [vmem:[%s285 + $0x48] sm:$0xff]
      %v496 = vld [vmem:[%s285 + $0x50] sm:$0xff]
      %v497 = vld [vmem:[%s285 + $0x58] sm:$0xff]
      %v498 = vld [vmem:[%s285 + $0x60] sm:$0xff]
      %v499 = vld [vmem:[%s285 + $0x68] sm:$0xff]
      %v500 = vld [vmem:[%s285 + $0x70] sm:$0xff]
      %v501 = vld [vmem:[%s285 + $0x78] sm:$0xff]
      %v502 = vld [vmem:[%s268] sm:$0xf]
      %v503 = vld [vmem:[%s268 + $0x4] sm:$0xf]
      %v504 = vld [vmem:[%s268 + $0x8] sm:$0xf]
      %v505 = vld [vmem:[%s268 + $0xc] sm:$0xf]
      %v506 = vld [vmem:[%s268 + $0x10] sm:$0xf]
      %v507 = vld [vmem:[%s268 + $0x14] sm:$0xf]
      %v508 = vld [vmem:[%s268 + $0x18] sm:$0xf]
      %v509 = vld [vmem:[%s268 + $0x1c] sm:$0xf]
      %v510 = vld [vmem:[%s268 + $0x20] sm:$0xf]
      %v511 = vld [vmem:[%s268 + $0x24] sm:$0xf]
      %v512 = vld [vmem:[%s268 + $0x28] sm:$0xf]
      %v513 = vld [vmem:[%s268 + $0x2c] sm:$0xf]
      %v514 = vld [vmem:[%s268 + $0x30] sm:$0xf]
      %v515 = vld [vmem:[%s268 + $0x34] sm:$0xf]
      %v516 = vld [vmem:[%s268 + $0x38] sm:$0xf]
      %v517 = vld [vmem:[%s268 + $0x3c] sm:$0xf]
      %v518 = vpack.c.bf16 %v449, %v447
      %v519 = vpack.c.bf16 %v454, %v452
      %v520 = vpack.c.bf16 %v459, %v457
      %v521 = vpack.c.bf16 %v464, %v462
      %v522 = vpack.c.bf16 %v469, %v467
      %v523 = vpack.c.bf16 %v474, %v472
      %v524 = vpack.c.bf16 %v479, %v477
      %v525 = vpack.c.bf16 %v484, %v482
      %v542 = vunpack.c.l.b16 %v502
      %v543 = vunpack.c.l.b16 %v503
      %v544 = vunpack.c.l.b16 %v504
      %v545 = vunpack.c.l.b16 %v505
      %v546 = vunpack.c.l.b16 %v506
      %v547 = vunpack.c.l.b16 %v507
      %v548 = vunpack.c.l.b16 %v508
      %v549 = vunpack.c.l.b16 %v509
      %v550 = vunpack.c.l.b16 %v510
      %v551 = vunpack.c.l.b16 %v511
      %v552 = vunpack.c.l.b16 %v512
      %v553 = vunpack.c.l.b16 %v513
      %v554 = vunpack.c.l.b16 %v514
      %v555 = vunpack.c.l.b16 %v515
      %v556 = vunpack.c.l.b16 %v516
      %v557 = vunpack.c.l.b16 %v517
      %v558 = vpack.c.b16 %v543, %v542
      %v559 = vpack.c.b16 %v545, %v544
      %v560 = vpack.c.b16 %v547, %v546
      %v561 = vpack.c.b16 %v549, %v548
      %v562 = vpack.c.b16 %v551, %v550
      %v563 = vpack.c.b16 %v553, %v552
      %v564 = vpack.c.b16 %v555, %v554
      %v565 = vpack.c.b16 %v557, %v556
      %574 = vmatpush.bf16.msra.mxu0 %v525
      %575 = vmatpush.bf16.msra.mxu0 %v524
      %576 = vmatpush.bf16.msra.mxu0 %v523
      %577 = vmatpush.bf16.msra.mxu0 %v522
      %578 = vmatpush.bf16.msra.mxu0 %v521
      %579 = vmatpush.bf16.msra.mxu0 %v520
      %580 = vmatpush.bf16.msra.mxu0 %v519
      %581 = vmatpush.bf16.msra.mxu0 %v518
      %582 = vmatmul.bf16.gmra.mxu0 %v558
      %v583 = vpop.f32.mrf.mxu0
      %v584 = vadd.f32 0.0, %v583
      %v585 = vpop.f32.mrf.mxu0
      %v586 = vadd.f32 0.0, %v585
      %587 = vmatmul.bf16.gmra.mxu0 %v559
      %v588 = vpop.f32.mrf.mxu0
      %v589 = vadd.f32 0.0, %v588
      %v590 = vpop.f32.mrf.mxu0
      %v591 = vadd.f32 0.0, %v590
      %592 = vmatmul.bf16.gmra.mxu0 %v560
      %v593 = vpop.f32.mrf.mxu0
      %v594 = vadd.f32 0.0, %v593
      %v595 = vpop.f32.mrf.mxu0
      %v596 = vadd.f32 0.0, %v595
      %597 = vmatmul.bf16.gmra.mxu0 %v561
      %v598 = vpop.f32.mrf.mxu0
      %v599 = vadd.f32 0.0, %v598
      %v600 = vpop.f32.mrf.mxu0
      %v601 = vadd.f32 0.0, %v600
      %602 = vmatmul.bf16.gmra.mxu0 %v562
      %v603 = vpop.f32.mrf.mxu0
      %v604 = vadd.f32 0.0, %v603
      %v605 = vpop.f32.mrf.mxu0
      %v606 = vadd.f32 0.0, %v605
      %607 = vmatmul.bf16.gmra.mxu0 %v563
      %v608 = vpop.f32.mrf.mxu0
      %v609 = vadd.f32 0.0, %v608
      %v610 = vpop.f32.mrf.mxu0
      %v611 = vadd.f32 0.0, %v610
      %612 = vmatmul.bf16.gmra.mxu0 %v564
      %v613 = vpop.f32.mrf.mxu0
      %v614 = vadd.f32 0.0, %v613
      %v615 = vpop.f32.mrf.mxu0
      %v616 = vadd.f32 0.0, %v615
      %617 = vmatmul.bf16.gmra.mxu0 %v565
      %v618 = vpop.f32.mrf.mxu0
      %v619 = vadd.f32 0.0, %v618
      %v620 = vpop.f32.mrf.mxu0
      %v621 = vadd.f32 0.0, %v620
      %622 = vdwg.mxu0
      %v623 = vadd.f32 %v486, %v584
      %v624 = vadd.f32 %v487, %v586
      %v625 = vadd.f32 %v488, %v589
      %v626 = vadd.f32 %v489, %v591
      %v627 = vadd.f32 %v490, %v594
      %v628 = vadd.f32 %v491, %v596
      %v629 = vadd.f32 %v492, %v599
      %v630 = vadd.f32 %v493, %v601
      %v631 = vadd.f32 %v494, %v604
      %v632 = vadd.f32 %v495, %v606
      %v633 = vadd.f32 %v496, %v609
      %v634 = vadd.f32 %v497, %v611
      %v635 = vadd.f32 %v498, %v614
      %v636 = vadd.f32 %v499, %v616
      %v637 = vadd.f32 %v500, %v619
      %v638 = vadd.f32 %v501, %v621
      %639 = vst [vmem:[%s285] sm:$0xff] %v623
      %640 = vst [vmem:[%s285 + $0x8] sm:$0xff] %v624
      %641 = vst [vmem:[%s285 + $0x10] sm:$0xff] %v625
      %642 = vst [vmem:[%s285 + $0x18] sm:$0xff] %v626
      %643 = vst [vmem:[%s285 + $0x20] sm:$0xff] %v627
      %644 = vst [vmem:[%s285 + $0x28] sm:$0xff] %v628
      %645 = vst [vmem:[%s285 + $0x30] sm:$0xff] %v629
      %646 = vst [vmem:[%s285 + $0x38] sm:$0xff] %v630
      %647 = vst [vmem:[%s285 + $0x40] sm:$0xff] %v631
      %648 = vst [vmem:[%s285 + $0x48] sm:$0xff] %v632
      %649 = vst [vmem:[%s285 + $0x50] sm:$0xff] %v633
      %650 = vst [vmem:[%s285 + $0x58] sm:$0xff] %v634
      %651 = vst [vmem:[%s285 + $0x60] sm:$0xff] %v635
      %652 = vst [vmem:[%s285 + $0x68] sm:$0xff] %v636
      %653 = vst [vmem:[%s285 + $0x70] sm:$0xff] %v637
      %654 = vst [vmem:[%s285 + $0x78] sm:$0xff] %v638
      %p655 = scmp.eq.s32.totalorder %s21, 2
      %p656 = pnand %p655, %p288
      %p657 = pneg %p656
      // Predicated region
      $region41: #{rgcn_forward.5} parent=35 // pred_check
        _
      $region42: #{rgcn_forward.5} parent=35 // pred_check_branch
        %659 = sbr.rel (%p656) target = $region44
      $region43: #{rgcn_forward.5} parent=35 // pred_region
        %v660 = vld [vmem:[%s285] sm:$0xff]
        %v661 = vld [vmem:[%s285 + $0x8] sm:$0xff]
        %v662 = vld [vmem:[%s285 + $0x10] sm:$0xff]
        %v663 = vld [vmem:[%s285 + $0x18] sm:$0xff]
        %v664 = vld [vmem:[%s285 + $0x20] sm:$0xff]
        %v665 = vld [vmem:[%s285 + $0x28] sm:$0xff]
        %v666 = vld [vmem:[%s285 + $0x30] sm:$0xff]
        %v667 = vld [vmem:[%s285 + $0x38] sm:$0xff]
        %v668 = vld [vmem:[%s285 + $0x40] sm:$0xff]
        %v669 = vld [vmem:[%s285 + $0x48] sm:$0xff]
        %v670 = vld [vmem:[%s285 + $0x50] sm:$0xff]
        %v671 = vld [vmem:[%s285 + $0x58] sm:$0xff]
        %v672 = vld [vmem:[%s285 + $0x60] sm:$0xff]
        %v673 = vld [vmem:[%s285 + $0x68] sm:$0xff]
        %v674 = vld [vmem:[%s285 + $0x70] sm:$0xff]
        %v675 = vld [vmem:[%s285 + $0x78] sm:$0xff]
        %v676 = vmul.f32 %v660, 0.33333334
        %v677 = vmul.f32 %v661, 0.33333334
        %v678 = vmul.f32 %v662, 0.33333334
        %v679 = vmul.f32 %v663, 0.33333334
        %v680 = vmul.f32 %v664, 0.33333334
        %v681 = vmul.f32 %v665, 0.33333334
        %v682 = vmul.f32 %v666, 0.33333334
        %v683 = vmul.f32 %v667, 0.33333334
        %v684 = vmul.f32 %v668, 0.33333334
        %v685 = vmul.f32 %v669, 0.33333334
        %v686 = vmul.f32 %v670, 0.33333334
        %v687 = vmul.f32 %v671, 0.33333334
        %v688 = vmul.f32 %v672, 0.33333334
        %v689 = vmul.f32 %v673, 0.33333334
        %v690 = vmul.f32 %v674, 0.33333334
        %v691 = vmul.f32 %v675, 0.33333334
        %v692 = vld [vmem:[%s3] sm:$0x1]
        %v694 = vperm.slane %v692, 0
        %v696 = vadd.f32 %v676, %v694
        %v697 = vadd.f32 %v677, %v694
        %v698 = vadd.f32 %v678, %v694
        %v699 = vadd.f32 %v679, %v694
        %v700 = vadd.f32 %v680, %v694
        %v701 = vadd.f32 %v681, %v694
        %v702 = vadd.f32 %v682, %v694
        %v703 = vadd.f32 %v683, %v694
        %v704 = vadd.f32 %v684, %v694
        %v705 = vadd.f32 %v685, %v694
        %v706 = vadd.f32 %v686, %v694
        %v707 = vadd.f32 %v687, %v694
        %v708 = vadd.f32 %v688, %v694
        %v709 = vadd.f32 %v689, %v694
        %v710 = vadd.f32 %v690, %v694
        %v711 = vadd.f32 %v691, %v694
        %712 = vst [vmem:[%s285] sm:$0xff] %v696
        %713 = vst [vmem:[%s285 + $0x8] sm:$0xff] %v697
        %714 = vst [vmem:[%s285 + $0x10] sm:$0xff] %v698
        %715 = vst [vmem:[%s285 + $0x18] sm:$0xff] %v699
        %716 = vst [vmem:[%s285 + $0x20] sm:$0xff] %v700
        %717 = vst [vmem:[%s285 + $0x28] sm:$0xff] %v701
        %718 = vst [vmem:[%s285 + $0x30] sm:$0xff] %v702
        %719 = vst [vmem:[%s285 + $0x38] sm:$0xff] %v703
        %720 = vst [vmem:[%s285 + $0x40] sm:$0xff] %v704
        %721 = vst [vmem:[%s285 + $0x48] sm:$0xff] %v705
        %722 = vst [vmem:[%s285 + $0x50] sm:$0xff] %v706
        %723 = vst [vmem:[%s285 + $0x58] sm:$0xff] %v707
        %724 = vst [vmem:[%s285 + $0x60] sm:$0xff] %v708
        %725 = vst [vmem:[%s285 + $0x68] sm:$0xff] %v709
        %726 = vst [vmem:[%s285 + $0x70] sm:$0xff] %v710
        %727 = vst [vmem:[%s285 + $0x78] sm:$0xff] %v711
      $region44: #{rgcn_forward.5} parent=35 // pred_fallthru
        _
      %s728 = smul.u32 16, %s20
      %p729 = scmp.lt.s32.totalorder %s728, 15
      %s730 = scalar_select %p729, %s728, 15
      %s731 = smul.addr %s730, 8
      %s732 = scalar_lea.vmem %s4, %s731
      // Predicated region
      $region45: #{rgcn_forward.5} parent=35 // pred_check
        %p733 = pneg %p155
      $region46: #{rgcn_forward.5} parent=35 // pred_check_branch
        %735 = sbr.rel (%p733) target = $region48
      $region47: #{rgcn_forward.5} parent=35 // pred_region
        %s736 = smul.u32 16, %s20
      $region48: #{rgcn_forward.5} parent=35 // pred_fallthru
        _
      // Predicated region
      $region49: #{rgcn_forward.5} parent=35 // pred_check
        %p737 = pneg %p155
      $region50: #{rgcn_forward.5} parent=35 // pred_check_branch
        %739 = sbr.rel (%p737) target = $region52
      $region51: #{rgcn_forward.5} parent=35 // pred_region
        %s740 = smul.u32 16, %s20
        %p741 = scmp.lt.s32.totalorder %s740, 15
        %s742 = scalar_select %p741, %s740, 15
        %s743 = smul.addr %s742, 8
        %s744 = scalar_lea.vmem %s4, %s743
      $region52: #{rgcn_forward.5} parent=35 // pred_fallthru
        _
    $region36: #{rgcn_forward.5} parent=5 // pred_fallthru
      _
    %p745 = scmp.le.s32.totalorder 2, %s10
    // Predicated region
    $region53: #{rgcn_forward.5} parent=5 // pred_check
      %p746 = pneg %p745
    $region54: #{rgcn_forward.5} parent=5 // pred_check_branch
      %748 = sbr.rel (%p746) target = $region56
    $region55: #{rgcn_forward.5} parent=5 // pred_region
      %s749 = ssub.s32 %s10, 2
    $region56: #{rgcn_forward.5} parent=5 // pred_fallthru
      _
  $region6: #{rgcn_forward.5} parent=0 // loop_footer
    %s14 = sadd.s32 1, %s10
  $region7: #{rgcn_forward.5} parent=0 // loop_footer_branch
    %9 = sbr.rel target = $region3
  $region8: #{rgcn_forward.5} parent=0 // loop_exit
    _

// kernel: rgcn_forward.3
$region0: #{rgcn_forward.3}
  #allocation0 [shape = 'u32[]', space=smem, size = 0x4, offset = 0x4, fixed_abs, tag = 'smem constant byte address 0x4 - core index']
  #allocation1 [shape = 'u32[72,128]{1,0:T(1,128)}', space=vmem, size = 0x9000, scoped, tag = 'internal scratch']
  %s0 = inlined_call_operand.vmem [shape: bf16[3,128,128], index: 0, kind: input, shape index: {}]
  %s1 = inlined_call_operand.vmem [shape: bf16[128,128], index: 1, kind: input, shape index: {}]
  %s2 = inlined_call_operand.vmem [shape: bf16[3,128,128], index: 2, kind: input, shape index: {}]
  %s3 = inlined_call_operand.vmem [shape: f32[1,128], index: 3, kind: input, shape index: {}]
  %s4 = inlined_call_operand.vmem [shape: f32[128,128], index: 4, kind: output, shape index: {}]
  %s5 = sld [smem:[#allocation0]]
  $region57: #{rgcn_forward.3} parent=0
    _
  %s7 = ssub.s32 1, %s5
  %s8 = scalar_select 0, %s7, %s5
  loop: start=0, step=1, limit=5
  $region2: #{rgcn_forward.3} parent=0 // loop_pre_header
    _
  $region3: #{rgcn_forward.3} parent=0 // loop_header
    %s10 = sphi 0, %s14
    %p11 = scmp.ge.s32.totalorder %s10, 5
    %s17 = sphi 0, %s36
    %s18 = sphi 0, %s32
    %s19 = sphi 0, %s28
    %s20 = sphi 0, %s17
    %s21 = sphi 0, %s18
    %s22 = sphi 0, %s19
    %s23 = sphi 0, %s20
    %s24 = sphi 0, %s21
    %s25 = sphi 0, %s22
    %s43 = sphi 0, %s45
    %s46 = sphi 0, %s43
    %s47 = sphi 0, %s46
    %s63 = sphi 0, %s47
    %s69 = sphi 0, %s71
    %s72 = sphi 0, %s69
    %s73 = sphi 0, %s72
    %s89 = sphi 0, %s73
    %s95 = sphi 0, %s97
    %s98 = sphi 0, %s95
    %s99 = sphi 0, %s98
    %s115 = sphi 0, %s99
    %s119 = sphi 0, %s119
    %s121 = sphi 0, %s119
    %s122 = sphi 0, %s121
    %s136 = sphi 0, %s122
    %s142 = sphi 0, %s144
    %s145 = sphi 0, %s142
    %s146 = sphi 0, %s145
    %s162 = sphi 0, %s146
  $region4: #{rgcn_forward.3} parent=0 // loop_header_branch
    %13 = sbr.rel (%p11) target = $region8
  $region5: #{rgcn_forward.3} parent=0 // loop_body
    %s15 = ssub.s32 %s10, 1
    %s16 = ssub.s32 %s10, 2
    %s26 = sadd.s32 1, %s19
    %p27 = scmp.ge.s32.totalorder %s26, 1
    %s28 = scalar_select %p27, 0, %s26
    %s29 = sadd.s32 1, %s18
    %s30 = scalar_select %p27, %s29, %s18
    %p31 = scmp.ge.s32.totalorder %s30, 3
    %s32 = scalar_select %p31, 0, %s30
    %s33 = sadd.s32 1, %s17
    %s34 = scalar_select %p31, %s33, %s17
    %p35 = scmp.ge.s32.totalorder %s34, 1
    %s36 = scalar_select %p35, 0, %s34
    %s37 = ssub.s32 %s18, %s32
    %s38 = ssub.s32 %s17, %s36
    %s39 = sor.u32 %s37, %s38
    %s40 = ssub.s32 %s19, %s28
    %s41 = sor.u32 %s39, %s40
    %p42 = scmp.eq.s32.totalorder %s41, 0
    %s44 = sadd.s32 %s43, 1
    %s45 = scalar_select %p42, %s43, %s44
    %p48 = pneg %p42
    %p49 = scmp.eq.s32.totalorder %s10, 2
    %p50 = por %p48, %p49
    %p51 = scmp.ne.s32.totalorder %s43, %s46
    %p52 = scmp.eq.s32.totalorder %s10, 0
    %p53 = por %p51, %p52
    %p54 = scmp.ne.s32.totalorder %s43, %s46
    %p55 = scmp.eq.s32.totalorder %s15, 2
    %p56 = por %p54, %p55
    %p57 = scmp.ne.s32.totalorder %s46, %s47
    %p58 = scmp.eq.s32.totalorder %s15, 0
    %p59 = por %p57, %p58
    %p60 = scmp.ne.s32.totalorder %s46, %s47
    %p61 = scmp.eq.s32.totalorder %s16, 2
    %p62 = por %p60, %p61
    %p64 = scmp.ne.s32.totalorder %s47, %s63
    %p65 = scmp.eq.s32.totalorder %s16, 0
    %p66 = por %p64, %p65
    %s67 = ssub.s32 %s19, %s28
    %p68 = scmp.eq.s32.totalorder %s67, 0
    %s70 = sadd.s32 %s69, 1
    %s71 = scalar_select %p68, %s69, %s70
    %p74 = pneg %p68
    %p75 = scmp.eq.s32.totalorder %s10, 2
    %p76 = por %p74, %p75
    %p77 = scmp.ne.s32.totalorder %s69, %s72
    %p78 = scmp.eq.s32.totalorder %s10, 0
    %p79 = por %p77, %p78
    %p80 = scmp.ne.s32.totalorder %s69, %s72
    %p81 = scmp.eq.s32.totalorder %s15, 2
    %p82 = por %p80, %p81
    %p83 = scmp.ne.s32.totalorder %s72, %s73
    %p84 = scmp.eq.s32.totalorder %s15, 0
    %p85 = por %p83, %p84
    %p86 = scmp.ne.s32.totalorder %s72, %s73
    %p87 = scmp.eq.s32.totalorder %s16, 2
    %p88 = por %p86, %p87
    %p90 = scmp.ne.s32.totalorder %s73, %s89
    %p91 = scmp.eq.s32.totalorder %s16, 0
    %p92 = por %p90, %p91
    %s93 = ssub.s32 %s18, %s32
    %p94 = scmp.eq.s32.totalorder %s93, 0
    %s96 = sadd.s32 %s95, 1
    %s97 = scalar_select %p94, %s95, %s96
    %p100 = pneg %p94
    %p101 = scmp.eq.s32.totalorder %s10, 2
    %p102 = por %p100, %p101
    %p103 = scmp.ne.s32.totalorder %s95, %s98
    %p104 = scmp.eq.s32.totalorder %s10, 0
    %p105 = por %p103, %p104
    %p106 = scmp.ne.s32.totalorder %s95, %s98
    %p107 = scmp.eq.s32.totalorder %s15, 2
    %p108 = por %p106, %p107
    %p109 = scmp.ne.s32.totalorder %s98, %s99
    %p110 = scmp.eq.s32.totalorder %s15, 0
    %p111 = por %p109, %p110
    %p112 = scmp.ne.s32.totalorder %s98, %s99
    %p113 = scmp.eq.s32.totalorder %s16, 2
    %p114 = por %p112, %p113
    %p116 = scmp.ne.s32.totalorder %s99, %s115
    %p117 = scmp.eq.s32.totalorder %s16, 0
    %p118 = por %p116, %p117
    %s120 = sadd.s32 %s119, 1
    %p123 = scmp.eq.s32.totalorder %s10, 2
    %p124 = scmp.ne.s32.totalorder %s119, %s121
    %p125 = scmp.eq.s32.totalorder %s10, 0
    %p126 = por %p124, %p125
    %p127 = scmp.ne.s32.totalorder %s119, %s121
    %p128 = scmp.eq.s32.totalorder %s15, 2
    %p129 = por %p127, %p128
    %p130 = scmp.ne.s32.totalorder %s121, %s122
    %p131 = scmp.eq.s32.totalorder %s15, 0
    %p132 = por %p130, %p131
    %p133 = scmp.ne.s32.totalorder %s121, %s122
    %p134 = scmp.eq.s32.totalorder %s16, 2
    %p135 = por %p133, %p134
    %p137 = scmp.ne.s32.totalorder %s122, %s136
    %p138 = scmp.eq.s32.totalorder %s16, 0
    %p139 = por %p137, %p138
    %s140 = ssub.s32 %s17, %s36
    %p141 = scmp.eq.s32.totalorder %s140, 0
    %s143 = sadd.s32 %s142, 1
    %s144 = scalar_select %p141, %s142, %s143
    %p147 = pneg %p141
    %p148 = scmp.eq.s32.totalorder %s10, 2
    %p149 = por %p147, %p148
    %p150 = scmp.ne.s32.totalorder %s142, %s145
    %p151 = scmp.eq.s32.totalorder %s10, 0
    %p152 = por %p150, %p151
    %p153 = scmp.ne.s32.totalorder %s142, %s145
    %p154 = scmp.eq.s32.totalorder %s15, 2
    %p155 = por %p153, %p154
    %p156 = scmp.ne.s32.totalorder %s145, %s146
    %p157 = scmp.eq.s32.totalorder %s15, 0
    %p158 = por %p156, %p157
    %p159 = scmp.ne.s32.totalorder %s145, %s146
    %p160 = scmp.eq.s32.totalorder %s16, 2
    %p161 = por %p159, %p160
    %p163 = scmp.ne.s32.totalorder %s146, %s162
    %p164 = scmp.eq.s32.totalorder %s16, 0
    %p165 = por %p163, %p164
    %p166 = scmp.le.s32.totalorder 1, %s10
    %p167 = scmp.lt.s32.totalorder %s10, 4
    %p168 = pnand %p166, %p167
    %p169 = pneg %p168
    // Predicated region
    $region9: #{rgcn_forward.3} parent=5 // pred_check
      _
    $region10: #{rgcn_forward.3} parent=5 // pred_check_branch
      %171 = sbr.rel (%p168) target = $region12
    $region11: #{rgcn_forward.3} parent=5 // pred_region
      %s172 = ssub.s32 %s10, 1
      // Predicated region
      $region13: #{rgcn_forward.3} parent=11 // pred_check
        %p173 = pneg %p85
      $region14: #{rgcn_forward.3} parent=11 // pred_check_branch
        %175 = sbr.rel (%p173) target = $region16
      $region15: #{rgcn_forward.3} parent=11 // pred_region
        %s176 = smul.u32 16, %s22
        %p177 = scmp.lt.s32.totalorder %s176, 15
        %s178 = scalar_select %p177, %s176, 15
        %s179 = smul.addr %s178, 4
        %s180 = scalar_lea.vmem %s1, %s179
        %s181 = smul.u32 16, %s22
      $region16: #{rgcn_forward.3} parent=11 // pred_fallthru
        _
      // Predicated region
      $region17: #{rgcn_forward.3} parent=11 // pred_check
        %p182 = pneg %p132
      $region18: #{rgcn_forward.3} parent=11 // pred_check_branch
        %184 = sbr.rel (%p182) target = $region20
      $region19: #{rgcn_forward.3} parent=11 // pred_region
        _
      $region20: #{rgcn_forward.3} parent=11 // pred_fallthru
        _
    $region12: #{rgcn_forward.3} parent=5 // pred_fallthru
      _
    %p185 = scmp.lt.s32.totalorder %s10, 3
    // Predicated region
    $region21: #{rgcn_forward.3} parent=5 // pred_check
      %p186 = pneg %p185
    $region22: #{rgcn_forward.3} parent=5 // pred_check_branch
      %188 = sbr.rel (%p186) target = $region24
    $region23: #{rgcn_forward.3} parent=5 // pred_region
      // Predicated region
      $region25: #{rgcn_forward.3} parent=23 // pred_check
        %p189 = pneg %p53
      $region26: #{rgcn_forward.3} parent=23 // pred_check_branch
        %191 = sbr.rel (%p189) target = $region28
      $region27: #{rgcn_forward.3} parent=23 // pred_region
        %s192 = smul.u32 16, %s17
        %p193 = scmp.lt.s32.totalorder %s18, 2
        %s194 = scalar_select %p193, %s18, 2
        %p195 = scmp.lt.s32.totalorder %s192, 15
        %s196 = scalar_select %p195, %s192, 15
        %p197 = scmp.lt.s32.totalorder %s19, 0
        %s198 = scalar_select %p197, %s19, 0
        %s199 = sadd.s32 %s198, %s196
        %s200 = smul.addr %s194, 16
        %s201 = sadd.s32 %s199, %s200
        %s202 = smul.addr %s201, 4
        %s203 = scalar_lea.vmem %s0, %s202
        %s204 = smul.u32 16, %s17
      $region28: #{rgcn_forward.3} parent=23 // pred_fallthru
        _
      // Predicated region
      $region29: #{rgcn_forward.3} parent=23 // pred_check
        %p205 = pneg %p105
      $region30: #{rgcn_forward.3} parent=23 // pred_check_branch
        %207 = sbr.rel (%p205) target = $region32
      $region31: #{rgcn_forward.3} parent=23 // pred_region
        %p208 = scmp.lt.s32.totalorder %s18, 2
        %s209 = scalar_select %p208, %s18, 2
        %s210 = smul.addr %s209, 16
        %s211 = smul.addr %s210, 4
        %s212 = scalar_lea.vmem %s2, %s211
      $region32: #{rgcn_forward.3} parent=23 // pred_fallthru
        _
    $region24: #{rgcn_forward.3} parent=5 // pred_fallthru
      _
    %p213 = scmp.le.s32.totalorder 1, %s10
    %p214 = scmp.lt.s32.totalorder %s10, 4
    %p215 = pnand %p213, %p214
    %p216 = pneg %p215
    // Predicated region
    $region33: #{rgcn_forward.3} parent=5 // pred_check
      _
    $region34: #{rgcn_forward.3} parent=5 // pred_check_branch
      %218 = sbr.rel (%p215) target = $region36
    $region35: #{rgcn_forward.3} parent=5 // pred_region
      %s219 = ssub.s32 %s10, 1
      %s220 = smul.u32 16, %s20
      %p221 = scmp.lt.s32.totalorder %s21, 2
      %s222 = scalar_select %p221, %s21, 2
      %p223 = scmp.lt.s32.totalorder %s220, 15
      %s224 = scalar_select %p223, %s220, 15
      %p225 = scmp.lt.s32.totalorder %s22, 0
      %s226 = scalar_select %p225, %s22, 0
      %s227 = sadd.s32 %s226, %s224
      %s228 = smul.addr %s222, 16
      %s229 = sadd.s32 %s227, %s228
      %s230 = smul.addr %s229, 4
      %s231 = scalar_lea.vmem %s0, %s230
      %p232 = pneg %p59
      %p233 = pneg %p56
      %s234 = smul.u32 16, %s22
      %p235 = scmp.lt.s32.totalorder %s234, 15
      %s236 = scalar_select %p235, %s234, 15
      %s237 = smul.addr %s236, 4
      %s238 = scalar_lea.vmem %s1, %s237
      %p239 = pneg %p85
      %p240 = pneg %p82
      %p241 = scmp.lt.s32.totalorder %s21, 2
      %s242 = scalar_select %p241, %s21, 2
      %s243 = smul.addr %s242, 16
      %s244 = smul.addr %s243, 4
      %s245 = scalar_lea.vmem %s2, %s244
      %p246 = pneg %p111
      %p247 = pneg %p108
      %p248 = pneg %p132
      %p249 = pneg %p129
      %p250 = pneg %p158
      %p251 = pneg %p155
      %s252 = smul.u32 16, %s20
      %p253 = scmp.lt.s32.totalorder %s252, 15
      %s254 = scalar_select %p253, %s252, 15
      %s255 = smul.addr %s254, 8
      %s256 = scalar_lea.vmem %s4, %s255
      %s257 = smul.u32 16, %s20
      %p258 = scmp.lt.s32.totalorder %s21, 2
      %s259 = scalar_select %p258, %s21, 2
      %p260 = scmp.lt.s32.totalorder %s257, 15
      %s261 = scalar_select %p260, %s257, 15
      %p262 = scmp.lt.s32.totalorder %s22, 0
      %s263 = scalar_select %p262, %s22, 0
      %s264 = sadd.s32 %s263, %s261
      %s265 = smul.addr %s259, 16
      %s266 = sadd.s32 %s264, %s265
      %s267 = smul.addr %s266, 4
      %s268 = scalar_lea.vmem %s0, %s267
      %s269 = smul.u32 16, %s20
      %s270 = smul.u32 16, %s22
      %p271 = scmp.lt.s32.totalorder %s270, 15
      %s272 = scalar_select %p271, %s270, 15
      %s273 = smul.addr %s272, 4
      %s274 = scalar_lea.vmem %s1, %s273
      %s275 = smul.u32 16, %s22
      %p276 = scmp.lt.s32.totalorder %s21, 2
      %s277 = scalar_select %p276, %s21, 2
      %s278 = smul.addr %s277, 16
      %s279 = smul.addr %s278, 4
      %s280 = scalar_lea.vmem %s2, %s279
      %s281 = smul.u32 16, %s20
      %p282 = scmp.lt.s32.totalorder %s281, 15
      %s283 = scalar_select %p282, %s281, 15
      %s284 = smul.addr %s283, 8
      %s285 = scalar_lea.vmem %s4, %s284
      %s286 = smul.u32 16, %s20
      %p287 = scmp.eq.s32.totalorder %s21, 0
      %p288 = scmp.eq.s32.totalorder %s22, 0
      %p289 = pnand %p287, %p288
      %p290 = pneg %p289
      // Predicated region
      $region37: #{rgcn_forward.3} parent=35 // pred_check
        _
      $region38: #{rgcn_forward.3} parent=35 // pred_check_branch
        %292 = sbr.rel (%p289) target = $region40
      $region39: #{rgcn_forward.3} parent=35 // pred_region
        %293 = vst [vmem:[%s285] sm:$0xff] 0.0
        %294 = vst [vmem:[%s285 + $0x8] sm:$0xff] 0.0
        %295 = vst [vmem:[%s285 + $0x10] sm:$0xff] 0.0
        %296 = vst [vmem:[%s285 + $0x18] sm:$0xff] 0.0
        %297 = vst [vmem:[%s285 + $0x20] sm:$0xff] 0.0
        %298 = vst [vmem:[%s285 + $0x28] sm:$0xff] 0.0
        %299 = vst [vmem:[%s285 + $0x30] sm:$0xff] 0.0
        %300 = vst [vmem:[%s285 + $0x38] sm:$0xff] 0.0
        %301 = vst [vmem:[%s285 + $0x40] sm:$0xff] 0.0
        %302 = vst [vmem:[%s285 + $0x48] sm:$0xff] 0.0
        %303 = vst [vmem:[%s285 + $0x50] sm:$0xff] 0.0
        %304 = vst [vmem:[%s285 + $0x58] sm:$0xff] 0.0
        %305 = vst [vmem:[%s285 + $0x60] sm:$0xff] 0.0
        %306 = vst [vmem:[%s285 + $0x68] sm:$0xff] 0.0
        %307 = vst [vmem:[%s285 + $0x70] sm:$0xff] 0.0
        %308 = vst [vmem:[%s285 + $0x78] sm:$0xff] 0.0
      $region40: #{rgcn_forward.3} parent=35 // pred_fallthru
        _
      %v309 = vld [vmem:[%s274] sm:$0xf]
      %v310 = vld [vmem:[%s274 + $0x4] sm:$0xf]
      %v311 = vld [vmem:[%s274 + $0x8] sm:$0xf]
      %v312 = vld [vmem:[%s274 + $0xc] sm:$0xf]
      %v313 = vld [vmem:[%s274 + $0x10] sm:$0xf]
      %v314 = vld [vmem:[%s274 + $0x14] sm:$0xf]
      %v315 = vld [vmem:[%s274 + $0x18] sm:$0xf]
      %v316 = vld [vmem:[%s274 + $0x1c] sm:$0xf]
      %v317 = vld [vmem:[%s274 + $0x20] sm:$0xf]
      %v318 = vld [vmem:[%s274 + $0x24] sm:$0xf]
      %v319 = vld [vmem:[%s274 + $0x28] sm:$0xf]
      %v320 = vld [vmem:[%s274 + $0x2c] sm:$0xf]
      %v321 = vld [vmem:[%s274 + $0x30] sm:$0xf]
      %v322 = vld [vmem:[%s274 + $0x34] sm:$0xf]
      %v323 = vld [vmem:[%s274 + $0x38] sm:$0xf]
      %v324 = vld [vmem:[%s274 + $0x3c] sm:$0xf]
      %v325 = vld [vmem:[%s280] sm:$0xf]
      %v326 = vld [vmem:[%s280 + $0x4] sm:$0xf]
      %v327 = vld [vmem:[%s280 + $0x8] sm:$0xf]
      %v328 = vld [vmem:[%s280 + $0xc] sm:$0xf]
      %v329 = vld [vmem:[%s280 + $0x10] sm:$0xf]
      %v330 = vld [vmem:[%s280 + $0x14] sm:$0xf]
      %v331 = vld [vmem:[%s280 + $0x18] sm:$0xf]
      %v332 = vld [vmem:[%s280 + $0x1c] sm:$0xf]
      %v333 = vld [vmem:[%s280 + $0x20] sm:$0xf]
      %v334 = vld [vmem:[%s280 + $0x24] sm:$0xf]
      %v335 = vld [vmem:[%s280 + $0x28] sm:$0xf]
      %v336 = vld [vmem:[%s280 + $0x2c] sm:$0xf]
      %v337 = vld [vmem:[%s280 + $0x30] sm:$0xf]
      %v338 = vld [vmem:[%s280 + $0x34] sm:$0xf]
      %v339 = vld [vmem:[%s280 + $0x38] sm:$0xf]
      %v340 = vld [vmem:[%s280 + $0x3c] sm:$0xf]
      %v357 = vunpack.c.l.b16 %v309
      %v358 = vunpack.c.l.b16 %v310
      %v359 = vunpack.c.l.b16 %v311
      %v360 = vunpack.c.l.b16 %v312
      %v361 = vunpack.c.l.b16 %v313
      %v362 = vunpack.c.l.b16 %v314
      %v363 = vunpack.c.l.b16 %v315
      %v364 = vunpack.c.l.b16 %v316
      %v365 = vunpack.c.l.b16 %v317
      %v366 = vunpack.c.l.b16 %v318
      %v367 = vunpack.c.l.b16 %v319
      %v368 = vunpack.c.l.b16 %v320
      %v369 = vunpack.c.l.b16 %v321
      %v370 = vunpack.c.l.b16 %v322
      %v371 = vunpack.c.l.b16 %v323
      %v372 = vunpack.c.l.b16 %v324
      %v373 = vpack.c.b16 %v358, %v357
      %v374 = vpack.c.b16 %v360, %v359
      %v375 = vpack.c.b16 %v362, %v361
      %v376 = vpack.c.b16 %v364, %v363
      %v377 = vpack.c.b16 %v366, %v365
      %v378 = vpack.c.b16 %v368, %v367
      %v379 = vpack.c.b16 %v370, %v369
      %v380 = vpack.c.b16 %v372, %v371
      %v405 = vunpack.c.l.b16 %v325
      %v406 = vunpack.c.l.b16 %v326
      %v407 = vunpack.c.l.b16 %v327
      %v408 = vunpack.c.l.b16 %v328
      %v409 = vunpack.c.l.b16 %v329
      %v410 = vunpack.c.l.b16 %v330
      %v411 = vunpack.c.l.b16 %v331
      %v412 = vunpack.c.l.b16 %v332
      %v413 = vunpack.c.l.b16 %v333
      %v414 = vunpack.c.l.b16 %v334
      %v415 = vunpack.c.l.b16 %v335
      %v416 = vunpack.c.l.b16 %v336
      %v417 = vunpack.c.l.b16 %v337
      %v418 = vunpack.c.l.b16 %v338
      %v419 = vunpack.c.l.b16 %v339
      %v420 = vunpack.c.l.b16 %v340
      %v421 = vpack.c.b16 %v406, %v405
      %v422 = vpack.c.b16 %v408, %v407
      %v423 = vpack.c.b16 %v410, %v409
      %v424 = vpack.c.b16 %v412, %v411
      %v425 = vpack.c.b16 %v414, %v413
      %v426 = vpack.c.b16 %v416, %v415
      %v427 = vpack.c.b16 %v418, %v417
      %v428 = vpack.c.b16 %v420, %v419
      %437 = vmatpush.bf16.msra.mxu0 %v428
      %438 = vmatpush.bf16.msra.mxu0 %v427
      %439 = vmatpush.bf16.msra.mxu0 %v426
      %440 = vmatpush.bf16.msra.mxu0 %v425
      %441 = vmatpush.bf16.msra.mxu0 %v424
      %442 = vmatpush.bf16.msra.mxu0 %v423
      %443 = vmatpush.bf16.msra.mxu0 %v422
      %444 = vmatpush.bf16.msra.mxu0 %v421
      %445 = vmatmul.bf16.gmra.mxu0 %v373
      %v446 = vpop.f32.mrf.mxu0
      %v447 = vadd.f32 0.0, %v446
      %v448 = vpop.f32.mrf.mxu0
      %v449 = vadd.f32 0.0, %v448
      %450 = vmatmul.bf16.gmra.mxu0 %v374
      %v451 = vpop.f32.mrf.mxu0
      %v452 = vadd.f32 0.0, %v451
      %v453 = vpop.f32.mrf.mxu0
      %v454 = vadd.f32 0.0, %v453
      %455 = vmatmul.bf16.gmra.mxu0 %v375
      %v456 = vpop.f32.mrf.mxu0
      %v457 = vadd.f32 0.0, %v456
      %v458 = vpop.f32.mrf.mxu0
      %v459 = vadd.f32 0.0, %v458
      %460 = vmatmul.bf16.gmra.mxu0 %v376
      %v461 = vpop.f32.mrf.mxu0
      %v462 = vadd.f32 0.0, %v461
      %v463 = vpop.f32.mrf.mxu0
      %v464 = vadd.f32 0.0, %v463
      %465 = vmatmul.bf16.gmra.mxu0 %v377
      %v466 = vpop.f32.mrf.mxu0
      %v467 = vadd.f32 0.0, %v466
      %v468 = vpop.f32.mrf.mxu0
      %v469 = vadd.f32 0.0, %v468
      %470 = vmatmul.bf16.gmra.mxu0 %v378
      %v471 = vpop.f32.mrf.mxu0
      %v472 = vadd.f32 0.0, %v471
      %v473 = vpop.f32.mrf.mxu0
      %v474 = vadd.f32 0.0, %v473
      %475 = vmatmul.bf16.gmra.mxu0 %v379
      %v476 = vpop.f32.mrf.mxu0
      %v477 = vadd.f32 0.0, %v476
      %v478 = vpop.f32.mrf.mxu0
      %v479 = vadd.f32 0.0, %v478
      %480 = vmatmul.bf16.gmra.mxu0 %v380
      %v481 = vpop.f32.mrf.mxu0
      %v482 = vadd.f32 0.0, %v481
      %v483 = vpop.f32.mrf.mxu0
      %v484 = vadd.f32 0.0, %v483
      %485 = vdwg.mxu0
      %v486 = vld [vmem:[%s285] sm:$0xff]
      %v487 = vld [vmem:[%s285 + $0x8] sm:$0xff]
      %v488 = vld [vmem:[%s285 + $0x10] sm:$0xff]
      %v489 = vld [vmem:[%s285 + $0x18] sm:$0xff]
      %v490 = vld [vmem:[%s285 + $0x20] sm:$0xff]
      %v491 = vld [vmem:[%s285 + $0x28] sm:$0xff]
      %v492 = vld [vmem:[%s285 + $0x30] sm:$0xff]
      %v493 = vld [vmem:[%s285 + $0x38] sm:$0xff]
      %v494 = vld [vmem:[%s285 + $0x40] sm:$0xff]
      %v495 = vld [vmem:[%s285 + $0x48] sm:$0xff]
      %v496 = vld [vmem:[%s285 + $0x50] sm:$0xff]
      %v497 = vld [vmem:[%s285 + $0x58] sm:$0xff]
      %v498 = vld [vmem:[%s285 + $0x60] sm:$0xff]
      %v499 = vld [vmem:[%s285 + $0x68] sm:$0xff]
      %v500 = vld [vmem:[%s285 + $0x70] sm:$0xff]
      %v501 = vld [vmem:[%s285 + $0x78] sm:$0xff]
      %v502 = vld [vmem:[%s268] sm:$0xf]
      %v503 = vld [vmem:[%s268 + $0x4] sm:$0xf]
      %v504 = vld [vmem:[%s268 + $0x8] sm:$0xf]
      %v505 = vld [vmem:[%s268 + $0xc] sm:$0xf]
      %v506 = vld [vmem:[%s268 + $0x10] sm:$0xf]
      %v507 = vld [vmem:[%s268 + $0x14] sm:$0xf]
      %v508 = vld [vmem:[%s268 + $0x18] sm:$0xf]
      %v509 = vld [vmem:[%s268 + $0x1c] sm:$0xf]
      %v510 = vld [vmem:[%s268 + $0x20] sm:$0xf]
      %v511 = vld [vmem:[%s268 + $0x24] sm:$0xf]
      %v512 = vld [vmem:[%s268 + $0x28] sm:$0xf]
      %v513 = vld [vmem:[%s268 + $0x2c] sm:$0xf]
      %v514 = vld [vmem:[%s268 + $0x30] sm:$0xf]
      %v515 = vld [vmem:[%s268 + $0x34] sm:$0xf]
      %v516 = vld [vmem:[%s268 + $0x38] sm:$0xf]
      %v517 = vld [vmem:[%s268 + $0x3c] sm:$0xf]
      %v518 = vpack.c.bf16 %v449, %v447
      %v519 = vpack.c.bf16 %v454, %v452
      %v520 = vpack.c.bf16 %v459, %v457
      %v521 = vpack.c.bf16 %v464, %v462
      %v522 = vpack.c.bf16 %v469, %v467
      %v523 = vpack.c.bf16 %v474, %v472
      %v524 = vpack.c.bf16 %v479, %v477
      %v525 = vpack.c.bf16 %v484, %v482
      %v542 = vunpack.c.l.b16 %v502
      %v543 = vunpack.c.l.b16 %v503
      %v544 = vunpack.c.l.b16 %v504
      %v545 = vunpack.c.l.b16 %v505
      %v546 = vunpack.c.l.b16 %v506
      %v547 = vunpack.c.l.b16 %v507
      %v548 = vunpack.c.l.b16 %v508
      %v549 = vunpack.c.l.b16 %v509
      %v550 = vunpack.c.l.b16 %v510
      %v551 = vunpack.c.l.b16 %v511
      %v552 = vunpack.c.l.b16 %v512
      %v553 = vunpack.c.l.b16 %v513
      %v554 = vunpack.c.l.b16 %v514
      %v555 = vunpack.c.l.b16 %v515
      %v556 = vunpack.c.l.b16 %v516
      %v557 = vunpack.c.l.b16 %v517
      %v558 = vpack.c.b16 %v543, %v542
      %v559 = vpack.c.b16 %v545, %v544
      %v560 = vpack.c.b16 %v547, %v546
      %v561 = vpack.c.b16 %v549, %v548
      %v562 = vpack.c.b16 %v551, %v550
      %v563 = vpack.c.b16 %v553, %v552
      %v564 = vpack.c.b16 %v555, %v554
      %v565 = vpack.c.b16 %v557, %v556
      %574 = vmatpush.bf16.msra.mxu0 %v525
      %575 = vmatpush.bf16.msra.mxu0 %v524
      %576 = vmatpush.bf16.msra.mxu0 %v523
      %577 = vmatpush.bf16.msra.mxu0 %v522
      %578 = vmatpush.bf16.msra.mxu0 %v521
      %579 = vmatpush.bf16.msra.mxu0 %v520
      %580 = vmatpush.bf16.msra.mxu0 %v519
      %581 = vmatpush.bf16.msra.mxu0 %v518
      %582 = vmatmul.bf16.gmra.mxu0 %v558
      %v583 = vpop.f32.mrf.mxu0
      %v584 = vadd.f32 0.0, %v583
      %v585 = vpop.f32.mrf.mxu0
      %v586 = vadd.f32 0.0, %v585
      %587 = vmatmul.bf16.gmra.mxu0 %v559
      %v588 = vpop.f32.mrf.mxu0
      %v589 = vadd.f32 0.0, %v588
      %v590 = vpop.f32.mrf.mxu0
      %v591 = vadd.f32 0.0, %v590
      %592 = vmatmul.bf16.gmra.mxu0 %v560
      %v593 = vpop.f32.mrf.mxu0
      %v594 = vadd.f32 0.0, %v593
      %v595 = vpop.f32.mrf.mxu0
      %v596 = vadd.f32 0.0, %v595
      %597 = vmatmul.bf16.gmra.mxu0 %v561
      %v598 = vpop.f32.mrf.mxu0
      %v599 = vadd.f32 0.0, %v598
      %v600 = vpop.f32.mrf.mxu0
      %v601 = vadd.f32 0.0, %v600
      %602 = vmatmul.bf16.gmra.mxu0 %v562
      %v603 = vpop.f32.mrf.mxu0
      %v604 = vadd.f32 0.0, %v603
      %v605 = vpop.f32.mrf.mxu0
      %v606 = vadd.f32 0.0, %v605
      %607 = vmatmul.bf16.gmra.mxu0 %v563
      %v608 = vpop.f32.mrf.mxu0
      %v609 = vadd.f32 0.0, %v608
      %v610 = vpop.f32.mrf.mxu0
      %v611 = vadd.f32 0.0, %v610
      %612 = vmatmul.bf16.gmra.mxu0 %v564
      %v613 = vpop.f32.mrf.mxu0
      %v614 = vadd.f32 0.0, %v613
      %v615 = vpop.f32.mrf.mxu0
      %v616 = vadd.f32 0.0, %v615
      %617 = vmatmul.bf16.gmra.mxu0 %v565
      %v618 = vpop.f32.mrf.mxu0
      %v619 = vadd.f32 0.0, %v618
      %v620 = vpop.f32.mrf.mxu0
      %v621 = vadd.f32 0.0, %v620
      %622 = vdwg.mxu0
      %v623 = vadd.f32 %v486, %v584
      %v624 = vadd.f32 %v487, %v586
      %v625 = vadd.f32 %v488, %v589
      %v626 = vadd.f32 %v489, %v591
      %v627 = vadd.f32 %v490, %v594
      %v628 = vadd.f32 %v491, %v596
      %v629 = vadd.f32 %v492, %v599
      %v630 = vadd.f32 %v493, %v601
      %v631 = vadd.f32 %v494, %v604
      %v632 = vadd.f32 %v495, %v606
      %v633 = vadd.f32 %v496, %v609
      %v634 = vadd.f32 %v497, %v611
      %v635 = vadd.f32 %v498, %v614
      %v636 = vadd.f32 %v499, %v616
      %v637 = vadd.f32 %v500, %v619
      %v638 = vadd.f32 %v501, %v621
      %639 = vst [vmem:[%s285] sm:$0xff] %v623
      %640 = vst [vmem:[%s285 + $0x8] sm:$0xff] %v624
      %641 = vst [vmem:[%s285 + $0x10] sm:$0xff] %v625
      %642 = vst [vmem:[%s285 + $0x18] sm:$0xff] %v626
      %643 = vst [vmem:[%s285 + $0x20] sm:$0xff] %v627
      %644 = vst [vmem:[%s285 + $0x28] sm:$0xff] %v628
      %645 = vst [vmem:[%s285 + $0x30] sm:$0xff] %v629
      %646 = vst [vmem:[%s285 + $0x38] sm:$0xff] %v630
      %647 = vst [vmem:[%s285 + $0x40] sm:$0xff] %v631
      %648 = vst [vmem:[%s285 + $0x48] sm:$0xff] %v632
      %649 = vst [vmem:[%s285 + $0x50] sm:$0xff] %v633
      %650 = vst [vmem:[%s285 + $0x58] sm:$0xff] %v634
      %651 = vst [vmem:[%s285 + $0x60] sm:$0xff] %v635
      %652 = vst [vmem:[%s285 + $0x68] sm:$0xff] %v636
      %653 = vst [vmem:[%s285 + $0x70] sm:$0xff] %v637
      %654 = vst [vmem:[%s285 + $0x78] sm:$0xff] %v638
      %p655 = scmp.eq.s32.totalorder %s21, 2
      %p656 = pnand %p655, %p288
      %p657 = pneg %p656
      // Predicated region
      $region41: #{rgcn_forward.3} parent=35 // pred_check
        _
      $region42: #{rgcn_forward.3} parent=35 // pred_check_branch
        %659 = sbr.rel (%p656) target = $region44
      $region43: #{rgcn_forward.3} parent=35 // pred_region
        %v660 = vld [vmem:[%s285] sm:$0xff]
        %v661 = vld [vmem:[%s285 + $0x8] sm:$0xff]
        %v662 = vld [vmem:[%s285 + $0x10] sm:$0xff]
        %v663 = vld [vmem:[%s285 + $0x18] sm:$0xff]
        %v664 = vld [vmem:[%s285 + $0x20] sm:$0xff]
        %v665 = vld [vmem:[%s285 + $0x28] sm:$0xff]
        %v666 = vld [vmem:[%s285 + $0x30] sm:$0xff]
        %v667 = vld [vmem:[%s285 + $0x38] sm:$0xff]
        %v668 = vld [vmem:[%s285 + $0x40] sm:$0xff]
        %v669 = vld [vmem:[%s285 + $0x48] sm:$0xff]
        %v670 = vld [vmem:[%s285 + $0x50] sm:$0xff]
        %v671 = vld [vmem:[%s285 + $0x58] sm:$0xff]
        %v672 = vld [vmem:[%s285 + $0x60] sm:$0xff]
        %v673 = vld [vmem:[%s285 + $0x68] sm:$0xff]
        %v674 = vld [vmem:[%s285 + $0x70] sm:$0xff]
        %v675 = vld [vmem:[%s285 + $0x78] sm:$0xff]
        %v676 = vmul.f32 %v660, 0.33333334
        %v677 = vmul.f32 %v661, 0.33333334
        %v678 = vmul.f32 %v662, 0.33333334
        %v679 = vmul.f32 %v663, 0.33333334
        %v680 = vmul.f32 %v664, 0.33333334
        %v681 = vmul.f32 %v665, 0.33333334
        %v682 = vmul.f32 %v666, 0.33333334
        %v683 = vmul.f32 %v667, 0.33333334
        %v684 = vmul.f32 %v668, 0.33333334
        %v685 = vmul.f32 %v669, 0.33333334
        %v686 = vmul.f32 %v670, 0.33333334
        %v687 = vmul.f32 %v671, 0.33333334
        %v688 = vmul.f32 %v672, 0.33333334
        %v689 = vmul.f32 %v673, 0.33333334
        %v690 = vmul.f32 %v674, 0.33333334
        %v691 = vmul.f32 %v675, 0.33333334
        %v692 = vld [vmem:[%s3] sm:$0x1]
        %v694 = vperm.slane %v692, 0
        %v696 = vadd.f32 %v676, %v694
        %v697 = vadd.f32 %v677, %v694
        %v698 = vadd.f32 %v678, %v694
        %v699 = vadd.f32 %v679, %v694
        %v700 = vadd.f32 %v680, %v694
        %v701 = vadd.f32 %v681, %v694
        %v702 = vadd.f32 %v682, %v694
        %v703 = vadd.f32 %v683, %v694
        %v704 = vadd.f32 %v684, %v694
        %v705 = vadd.f32 %v685, %v694
        %v706 = vadd.f32 %v686, %v694
        %v707 = vadd.f32 %v687, %v694
        %v708 = vadd.f32 %v688, %v694
        %v709 = vadd.f32 %v689, %v694
        %v710 = vadd.f32 %v690, %v694
        %v711 = vadd.f32 %v691, %v694
        %v712 = vmax.f32 %v696, 0.0
        %v713 = vmax.f32 %v697, 0.0
        %v714 = vmax.f32 %v698, 0.0
        %v715 = vmax.f32 %v699, 0.0
        %v716 = vmax.f32 %v700, 0.0
        %v717 = vmax.f32 %v701, 0.0
        %v718 = vmax.f32 %v702, 0.0
        %v719 = vmax.f32 %v703, 0.0
        %v720 = vmax.f32 %v704, 0.0
        %v721 = vmax.f32 %v705, 0.0
        %v722 = vmax.f32 %v706, 0.0
        %v723 = vmax.f32 %v707, 0.0
        %v724 = vmax.f32 %v708, 0.0
        %v725 = vmax.f32 %v709, 0.0
        %v726 = vmax.f32 %v710, 0.0
        %v727 = vmax.f32 %v711, 0.0
        %728 = vst [vmem:[%s285] sm:$0xff] %v712
        %729 = vst [vmem:[%s285 + $0x8] sm:$0xff] %v713
        %730 = vst [vmem:[%s285 + $0x10] sm:$0xff] %v714
        %731 = vst [vmem:[%s285 + $0x18] sm:$0xff] %v715
        %732 = vst [vmem:[%s285 + $0x20] sm:$0xff] %v716
        %733 = vst [vmem:[%s285 + $0x28] sm:$0xff] %v717
        %734 = vst [vmem:[%s285 + $0x30] sm:$0xff] %v718
        %735 = vst [vmem:[%s285 + $0x38] sm:$0xff] %v719
        %736 = vst [vmem:[%s285 + $0x40] sm:$0xff] %v720
        %737 = vst [vmem:[%s285 + $0x48] sm:$0xff] %v721
        %738 = vst [vmem:[%s285 + $0x50] sm:$0xff] %v722
        %739 = vst [vmem:[%s285 + $0x58] sm:$0xff] %v723
        %740 = vst [vmem:[%s285 + $0x60] sm:$0xff] %v724
        %741 = vst [vmem:[%s285 + $0x68] sm:$0xff] %v725
        %742 = vst [vmem:[%s285 + $0x70] sm:$0xff] %v726
        %743 = vst [vmem:[%s285 + $0x78] sm:$0xff] %v727
      $region44: #{rgcn_forward.3} parent=35 // pred_fallthru
        _
      %s744 = smul.u32 16, %s20
      %p745 = scmp.lt.s32.totalorder %s744, 15
      %s746 = scalar_select %p745, %s744, 15
      %s747 = smul.addr %s746, 8
      %s748 = scalar_lea.vmem %s4, %s747
      // Predicated region
      $region45: #{rgcn_forward.3} parent=35 // pred_check
        %p749 = pneg %p155
      $region46: #{rgcn_forward.3} parent=35 // pred_check_branch
        %751 = sbr.rel (%p749) target = $region48
      $region47: #{rgcn_forward.3} parent=35 // pred_region
        %s752 = smul.u32 16, %s20
      $region48: #{rgcn_forward.3} parent=35 // pred_fallthru
        _
      // Predicated region
      $region49: #{rgcn_forward.3} parent=35 // pred_check
        %p753 = pneg %p155
      $region50: #{rgcn_forward.3} parent=35 // pred_check_branch
        %755 = sbr.rel (%p753) target = $region52
      $region51: #{rgcn_forward.3} parent=35 // pred_region
        %s756 = smul.u32 16, %s20
        %p757 = scmp.lt.s32.totalorder %s756, 15
        %s758 = scalar_select %p757, %s756, 15
        %s759 = smul.addr %s758, 8
        %s760 = scalar_lea.vmem %s4, %s759
      $region52: #{rgcn_forward.3} parent=35 // pred_fallthru
        _
    $region36: #{rgcn_forward.3} parent=5 // pred_fallthru
      _
    %p761 = scmp.le.s32.totalorder 2, %s10
    // Predicated region
    $region53: #{rgcn_forward.3} parent=5 // pred_check
      %p762 = pneg %p761
    $region54: #{rgcn_forward.3} parent=5 // pred_check_branch
      %764 = sbr.rel (%p762) target = $region56
    $region55: #{rgcn_forward.3} parent=5 // pred_region
      %s765 = ssub.s32 %s10, 2
    $region56: #{rgcn_forward.3} parent=5 // pred_fallthru
      _
  $region6: #{rgcn_forward.3} parent=0 // loop_footer
    %s14 = sadd.s32 1, %s10
  $region7: #{rgcn_forward.3} parent=0 // loop_footer_branch
    %9 = sbr.rel target = $region3
  $region8: #{rgcn_forward.3} parent=0 // loop_exit
    _

</llo_original>
